<compile_context>
chip_gen: v7x
topology: tpu7x:2x2x1
jax: 0.10.0
libtpu: 0.0.40
codegen_flags: <defaults>
</compile_context>

<pallas_src>
import functools

import jax
import jax.numpy as jnp
from jax import lax
from jax.experimental import pallas as pl
from jax.experimental.pallas import tpu as pltpu

# Plain Python float: lowered as a literal inside kernels (never a captured
# jax.Array constant -- that was the previous compile failure).
NEG_INF = float("-inf")


def _round_up(x, m):
    return ((x + m - 1) // m) * m


def _pick_vocab_tile(V, tv_req):
    """Largest multiple of 128 that divides V and is <= tv_req (or V itself)."""
    if V % 128 != 0:
        return V  # full-extent block is always legal
    tv = min(_round_up(tv_req, 128), V)
    tv = (tv // 128) * 128
    while V % tv != 0:
        tv -= 128
    return max(tv, 128)


# --------------------------------------------------------------------------
# Pass 1: logits tile + streaming per-row top-k threshold.
# --------------------------------------------------------------------------
def _logits_topk_kernel(h_ref, wt_ref, logits_ref, thresh_ref, topk_ref, *,
                        top_k):
    # h_ref:      (tm, H)   bf16   (resident across the vocab axis)
    # wt_ref:     (H, tv)   bf16   (one vocab tile of W^T)
    # logits_ref: (tm, tv)  f32    raw logits output tile
    # thresh_ref: (tm, 1)   f32    per-row k-th largest logit (written at end)
    # topk_ref:   (tm, k)   f32    running top-k scratch (persists over vocab)
    v = pl.program_id(1)

    @pl.when(v == 0)
    def _init():
        topk_ref[...] = jnp.full(topk_ref.shape, NEG_INF, topk_ref.dtype)

    # (tm, H) x (H, tv) -> (tm, tv) on the MXU, f32 accumulation.
    logits = jnp.dot(h_ref[...], wt_ref[...],
                     preferred_element_type=jnp.float32)
    logits_ref[...] = logits

    # Merge current tile into the running top-k: k unrolled knockout steps
    # over (scratch, tile) jointly (no concatenate needed).
    # NOTE: like the reference knockout, exact duplicate logit values collapse
    # (exact for distinct values, which holds w.p. 1 for continuous inputs).
    work_s = topk_ref[...]          # (tm, k)
    work_t = logits                 # (tm, tv)
    for j in range(top_k):          # static python loop -> fully unrolled
        m = jnp.maximum(jnp.max(work_s, axis=-1, keepdims=True),
                        jnp.max(work_t, axis=-1, keepdims=True))
        topk_ref[:, j:j + 1] = m
        work_s = jnp.where(work_s >= m, NEG_INF, work_s)
        work_t = jnp.where(work_t >= m, NEG_INF, work_t)

    @pl.when(v == pl.num_programs(1) - 1)
    def _finalize():
        thresh_ref[...] = jnp.min(topk_ref[...], axis=-1, keepdims=True)


# --------------------------------------------------------------------------
# Pass 2: mask logits below the per-row threshold to -inf.
# --------------------------------------------------------------------------
def _mask_kernel(thresh_ref, logits_ref, out_ref):
    t = thresh_ref[...]             # (tm, 1)
    x = logits_ref[...]             # (tm, tv)
    out_ref[...] = jnp.where(x >= t, x, NEG_INF)


# --------------------------------------------------------------------------
# Wrapper
# --------------------------------------------------------------------------
def routing_lm_head(hidden, weight, *, top_k=32, tm=256, tv=2048,
                    compute_dtype=jnp.bfloat16):
    """hidden: [B, S, H] or [B, H]; weight: [V, H]; returns masked logits."""
    orig_ndim = hidden.ndim
    if orig_ndim == 3:
        B, S, H = hidden.shape
        hidden_flat = hidden.reshape(-1, H)
    elif orig_ndim == 2:
        B, H = hidden.shape
        S = 1
        hidden_flat = hidden
    else:
        raise ValueError("Unsupported input shape")

    V, Hw = weight.shape
    assert Hw == H
    assert top_k <= V

    # bf16 operands, f32 accumulation.  Pre-transpose weight to [H, V].
    h_c = hidden_flat.astype(compute_dtype)
    wt = jnp.asarray(weight, compute_dtype).T            # (H, V)

    # Row tiling (adaptive so tiny inputs don't pad to 256 rows).
    N = h_c.shape[0]
    tm = _round_up(max(8, min(tm, _round_up(N, 8))), 8)
    pad = (-N) % tm
    if pad:
        h_c = jnp.pad(h_c, ((0, pad), (0, 0)))
    Np = h_c.shape[0]

    tv = _pick_vocab_tile(V, tv)
    R, Vt = Np // tm, V // tv

    # VMEM budget (double-buffered inputs/outputs) -> raise scoped limit only
    # if needed (keeps the default on small problems / v7x-friendly).
    itemsize = jnp.dtype(compute_dtype).itemsize
    est_vmem = (2 * (tm * H + H * tv) * itemsize        # hidden + weight tiles
                + 2 * tm * tv * 4 + 2 * tm * 4          # logits + thresh tiles
                + tm * top_k * 4)                       # top-k scratch
    vmem_limit = None
    if est_vmem > 32 * 1024 * 1024:
        vmem_limit = min(int(1.5 * est_vmem), 128 * 1024 * 1024)

    cost1 = pl.CostEstimate(
        flops=2 * Np * V * H + 2 * top_k * Np * (V + top_k * Vt),
        transcendentals=0,
        bytes_accessed=(Np * H + R * V * H) * itemsize + Np * V * 4 + Np * 4)

    logits, thresh = pl.pallas_call(
        functools.partial(_logits_topk_kernel, top_k=top_k),
        out_shape=(jax.ShapeDtypeStruct((Np, V), jnp.float32),
                   jax.ShapeDtypeStruct((Np, 1), jnp.float32)),
        grid_spec=pltpu.PrefetchScalarGridSpec(
            num_scalar_prefetch=0,
            grid=(R, Vt),
            in_specs=[
                pl.BlockSpec((tm, H), lambda r, v: (r, 0)),   # hidden rows
                pl.BlockSpec((H, tv), lambda r, v: (0, v)),   # W^T vocab tile
            ],
            out_specs=(
                pl.BlockSpec((tm, tv), lambda r, v: (r, v)),  # raw logits
                pl.BlockSpec((tm, 1), lambda r, v: (r, 0)),   # threshold
            ),
            scratch_shapes=[pltpu.VMEM((tm, top_k), jnp.float32)],
        ),
        compiler_params=pltpu.CompilerParams(
            dimension_semantics=("parallel", "arbitrary"),
            vmem_limit_bytes=vmem_limit),
        cost_estimate=cost1,
    )(h_c, wt)

    cost2 = pl.CostEstimate(flops=Np * V, transcendentals=0,
                            bytes_accessed=2 * Np * V * 4 + Np * 4)

    out = pl.pallas_call(
        _mask_kernel,
        out_shape=jax.ShapeDtypeStruct((Np, V), jnp.float32),
        grid_spec=pltpu.PrefetchScalarGridSpec(
            num_scalar_prefetch=0,
            grid=(R, Vt),
            in_specs=[
                pl.BlockSpec((tm, 1), lambda r, v: (r, 0)),
                pl.BlockSpec((tm, tv), lambda r, v: (r, v)),
            ],
            out_specs=pl.BlockSpec((tm, tv), lambda r, v: (r, v)),
        ),
        compiler_params=pltpu.CompilerParams(
            dimension_semantics=("parallel", "parallel"),
            vmem_limit_bytes=vmem_limit),
        cost_estimate=cost2,
    )(thresh, logits)

    out = out[:N]
    if orig_ndim == 3 and S > 1:
        return out.reshape(B, S, V)
    return out  # matches PyTorch: seq_len == 1 collapses to [batch, vocab]


def _reference(hidden, weight, top_k, compute_dtype=jnp.bfloat16):
    """Pure-JAX reference with the same bf16-operand / f32-accum numerics."""
    if hidden.ndim == 3:
        B, S, H = hidden.shape
        hf = hidden.reshape(-1, H)
    else:
        B, H = hidden.shape
        S = 1
        hf = hidden
    logits = jnp.dot(hf.astype(compute_dtype),
                     weight.astype(compute_dtype).T,
                     preferred_element_type=jnp.float32)
    vals, _ = lax.top_k(logits, top_k)
    thresh = vals[:, -1:]
    masked = jnp.where(logits >= thresh, logits, NEG_INF)
    if hidden.ndim == 3 and S > 1:
        return masked.reshape(B, S, weight.shape[0])
    return masked


if __name__ == "__main__":
    key = jax.random.PRNGKey(0)
    k_w, k_h = jax.random.split(key)

    batch, seq, hidden_dim, vocab_size, top_k = 2, 8, 32, 512, 32

    weight = jax.random.normal(k_w, (vocab_size, hidden_dim), jnp.float32)
    hidden = jax.random.normal(k_h, (batch, seq, hidden_dim), jnp.float32)

    out = routing_lm_head(hidden, weight, top_k=top_k)
    out = jax.block_until_ready(out)

    ref = _reference(hidden, weight, top_k)
    finite = jnp.isfinite(ref)

    assert out.shape == (batch, seq, vocab_size)
    # masks must match; values must match where finite
    assert bool(jnp.all(jnp.isfinite(out) == finite))
    assert bool(jnp.allclose(jnp.where(finite, out, 0.0),
                             jnp.where(finite, ref, 0.0),
                             atol=1e-3, rtol=1e-3))

    print("KERNEL_OK")
</pallas_src>

<mosaic_0001>
module attributes {stable_mosaic.version = 11 : i64} {
  func.func @_logits_topk_kernel(%arg0: i32, %arg1: i32, %arg2: memref<16x32xbf16, #tpu.memory_space<vmem>>, %arg3: memref<32x512xbf16, #tpu.memory_space<vmem>>, %arg4: memref<16x512xf32, #tpu.memory_space<vmem>>, %arg5: memref<16x1xf32, #tpu.memory_space<vmem>>, %arg6: memref<16x32xf32, #tpu.memory_space<vmem>>) attributes {dimension_semantics = [#tpu.dimension_semantics<parallel>, #tpu.dimension_semantics<arbitrary>], iteration_bounds = array<i64: 1, 1>, scalar_prefetch = 0 : i64, scratch_operands = 1 : i64, tpu.core_type = #tpu.core_type<tc>, window_params = [{transform_indices = @transform_0, window_bounds = array<i64: 16, 32>}, {transform_indices = @transform_1, window_bounds = array<i64: 32, 512>}, {transform_indices = @transform_2, window_bounds = array<i64: 16, 512>}, {transform_indices = @transform_3, window_bounds = array<i64: 16, 1>}]} {
    %c0_i32 = arith.constant 0 : i32
    %0 = arith.cmpi eq, %arg1, %c0_i32 : i32
    %1 = arith.extui %0 : i1 to i32
    %c0_i32_0 = arith.constant 0 : i32
    %2 = arith.cmpi ne, %1, %c0_i32_0 : i32
    scf.if %2 {
      %cst_169 = arith.constant 0xFF800000 : f32
      %451 = vector.broadcast %cst_169 : f32 to vector<16x32xf32>
      %c0_170 = arith.constant 0 : index
      %c0_171 = arith.constant 0 : index
      %452 = vector.load %arg6[%c0_170, %c0_171] : memref<16x32xf32, #tpu.memory_space<vmem>>, vector<16x32xf32>
      tpu.vector_store %arg6[%c0_170, %c0_171], %451 {strides = array<i32>} : memref<16x32xf32, #tpu.memory_space<vmem>>, vector<16x32xf32>,
    } else {
    }
    %c0 = arith.constant 0 : index
    %c0_1 = arith.constant 0 : index
    %3 = vector.load %arg2[%c0, %c0_1] : memref<16x32xbf16, #tpu.memory_space<vmem>>, vector<16x32xbf16>
    %c0_2 = arith.constant 0 : index
    %c0_3 = arith.constant 0 : index
    %4 = vector.load %arg3[%c0_2, %c0_3] : memref<32x512xbf16, #tpu.memory_space<vmem>>, vector<32x512xbf16>
    %cst = arith.constant dense<0.000000e+00> : vector<16x512xf32>
    %5 = tpu.matmul %3, %4, %cst {dimension_numbers = #tpu.dot_dimension_numbers<[1], [0], [0], [1], [0, 0, 1, 1], [], []>} : vector<16x32xbf16>, vector<32x512xbf16>, vector<16x512xf32> -> vector<16x512xf32>
    %c0_4 = arith.constant 0 : index
    %c0_5 = arith.constant 0 : index
    %6 = vector.load %arg4[%c0_4, %c0_5] : memref<16x512xf32, #tpu.memory_space<vmem>>, vector<16x512xf32>
    tpu.vector_store %arg4[%c0_4, %c0_5], %5 {strides = array<i32>} : memref<16x512xf32, #tpu.memory_space<vmem>>, vector<16x512xf32>,
    %c0_6 = arith.constant 0 : index
    %c0_7 = arith.constant 0 : index
    %7 = vector.load %arg6[%c0_6, %c0_7] : memref<16x32xf32, #tpu.memory_space<vmem>>, vector<16x32xf32>
    %cst_8 = arith.constant dense<0xFF800000> : vector<16xf32>
    %8 = vector.multi_reduction <maximumf>, %7, %cst_8 [1] : vector<16x32xf32> to vector<16xf32>
    %9 = vector.shape_cast %8 : vector<16xf32> to vector<16x1xf32>
    %cst_9 = arith.constant dense<0xFF800000> : vector<16xf32>
    %10 = vector.multi_reduction <maximumf>, %5, %cst_9 [1] : vector<16x512xf32> to vector<16xf32>
    %11 = vector.shape_cast %10 : vector<16xf32> to vector<16x1xf32>
    %12 = arith.maximumf %9, %11 : vector<16x1xf32>
    %c0_10 = arith.constant 0 : index
    %c0_11 = arith.constant 0 : index
    %13 = vector.load %arg6[%c0_10, %c0_11] : memref<16x32xf32, #tpu.memory_space<vmem>>, vector<16x1xf32>
    tpu.vector_store %arg6[%c0_10, %c0_11], %12 {strides = array<i32>} : memref<16x32xf32, #tpu.memory_space<vmem>>, vector<16x1xf32>,
    %14 = vector.broadcast %12 : vector<16x1xf32> to vector<16x32xf32>
    %15 = arith.cmpf oge, %7, %14 : vector<16x32xf32>
    %cst_12 = arith.constant 0xFF800000 : f32
    %16 = vector.broadcast %cst_12 : f32 to vector<16x32xf32>
    %17 = arith.select %15, %16, %7 : vector<16x32xi1>, vector<16x32xf32>
    %18 = vector.broadcast %12 : vector<16x1xf32> to vector<16x512xf32>
    %19 = arith.cmpf oge, %5, %18 : vector<16x512xf32>
    %cst_13 = arith.constant 0xFF800000 : f32
    %20 = vector.broadcast %cst_13 : f32 to vector<16x512xf32>
    %21 = arith.select %19, %20, %5 : vector<16x512xi1>, vector<16x512xf32>
    %cst_14 = arith.constant dense<0xFF800000> : vector<16xf32>
    %22 = vector.multi_reduction <maximumf>, %17, %cst_14 [1] : vector<16x32xf32> to vector<16xf32>
    %23 = vector.shape_cast %22 : vector<16xf32> to vector<16x1xf32>
    %cst_15 = arith.constant dense<0xFF800000> : vector<16xf32>
    %24 = vector.multi_reduction <maximumf>, %21, %cst_15 [1] : vector<16x512xf32> to vector<16xf32>
    %25 = vector.shape_cast %24 : vector<16xf32> to vector<16x1xf32>
    %26 = arith.maximumf %23, %25 : vector<16x1xf32>
    %c0_16 = arith.constant 0 : index
    %c1 = arith.constant 1 : index
    %27 = vector.load %arg6[%c0_16, %c1] : memref<16x32xf32, #tpu.memory_space<vmem>>, vector<16x1xf32>
    tpu.vector_store %arg6[%c0_16, %c1], %26 {strides = array<i32>} : memref<16x32xf32, #tpu.memory_space<vmem>>, vector<16x1xf32>,
    %28 = vector.broadcast %26 : vector<16x1xf32> to vector<16x32xf32>
    %29 = arith.cmpf oge, %17, %28 : vector<16x32xf32>
    %cst_17 = arith.constant 0xFF800000 : f32
    %30 = vector.broadcast %cst_17 : f32 to vector<16x32xf32>
    %31 = arith.select %29, %30, %17 : vector<16x32xi1>, vector<16x32xf32>
    %32 = vector.broadcast %26 : vector<16x1xf32> to vector<16x512xf32>
    %33 = arith.cmpf oge, %21, %32 : vector<16x512xf32>
    %cst_18 = arith.constant 0xFF800000 : f32
    %34 = vector.broadcast %cst_18 : f32 to vector<16x512xf32>
    %35 = arith.select %33, %34, %21 : vector<16x512xi1>, vector<16x512xf32>
    %cst_19 = arith.constant dense<0xFF800000> : vector<16xf32>
    %36 = vector.multi_reduction <maximumf>, %31, %cst_19 [1] : vector<16x32xf32> to vector<16xf32>
    %37 = vector.shape_cast %36 : vector<16xf32> to vector<16x1xf32>
    %cst_20 = arith.constant dense<0xFF800000> : vector<16xf32>
    %38 = vector.multi_reduction <maximumf>, %35, %cst_20 [1] : vector<16x512xf32> to vector<16xf32>
    %39 = vector.shape_cast %38 : vector<16xf32> to vector<16x1xf32>
    %40 = arith.maximumf %37, %39 : vector<16x1xf32>
    %c0_21 = arith.constant 0 : index
    %c2 = arith.constant 2 : index
    %41 = vector.load %arg6[%c0_21, %c2] : memref<16x32xf32, #tpu.memory_space<vmem>>, vector<16x1xf32>
    tpu.vector_store %arg6[%c0_21, %c2], %40 {strides = array<i32>} : memref<16x32xf32, #tpu.memory_space<vmem>>, vector<16x1xf32>,
    %42 = vector.broadcast %40 : vector<16x1xf32> to vector<16x32xf32>
    %43 = arith.cmpf oge, %31, %42 : vector<16x32xf32>
    %cst_22 = arith.constant 0xFF800000 : f32
    %44 = vector.broadcast %cst_22 : f32 to vector<16x32xf32>
    %45 = arith.select %43, %44, %31 : vector<16x32xi1>, vector<16x32xf32>
    %46 = vector.broadcast %40 : vector<16x1xf32> to vector<16x512xf32>
    %47 = arith.cmpf oge, %35, %46 : vector<16x512xf32>
    %cst_23 = arith.constant 0xFF800000 : f32
    %48 = vector.broadcast %cst_23 : f32 to vector<16x512xf32>
    %49 = arith.select %47, %48, %35 : vector<16x512xi1>, vector<16x512xf32>
    %cst_24 = arith.constant dense<0xFF800000> : vector<16xf32>
    %50 = vector.multi_reduction <maximumf>, %45, %cst_24 [1] : vector<16x32xf32> to vector<16xf32>
    %51 = vector.shape_cast %50 : vector<16xf32> to vector<16x1xf32>
    %cst_25 = arith.constant dense<0xFF800000> : vector<16xf32>
    %52 = vector.multi_reduction <maximumf>, %49, %cst_25 [1] : vector<16x512xf32> to vector<16xf32>
    %53 = vector.shape_cast %52 : vector<16xf32> to vector<16x1xf32>
    %54 = arith.maximumf %51, %53 : vector<16x1xf32>
    %c0_26 = arith.constant 0 : index
    %c3 = arith.constant 3 : index
    %55 = vector.load %arg6[%c0_26, %c3] : memref<16x32xf32, #tpu.memory_space<vmem>>, vector<16x1xf32>
    tpu.vector_store %arg6[%c0_26, %c3], %54 {strides = array<i32>} : memref<16x32xf32, #tpu.memory_space<vmem>>, vector<16x1xf32>,
    %56 = vector.broadcast %54 : vector<16x1xf32> to vector<16x32xf32>
    %57 = arith.cmpf oge, %45, %56 : vector<16x32xf32>
    %cst_27 = arith.constant 0xFF800000 : f32
    %58 = vector.broadcast %cst_27 : f32 to vector<16x32xf32>
    %59 = arith.select %57, %58, %45 : vector<16x32xi1>, vector<16x32xf32>
    %60 = vector.broadcast %54 : vector<16x1xf32> to vector<16x512xf32>
    %61 = arith.cmpf oge, %49, %60 : vector<16x512xf32>
    %cst_28 = arith.constant 0xFF800000 : f32
    %62 = vector.broadcast %cst_28 : f32 to vector<16x512xf32>
    %63 = arith.select %61, %62, %49 : vector<16x512xi1>, vector<16x512xf32>
    %cst_29 = arith.constant dense<0xFF800000> : vector<16xf32>
    %64 = vector.multi_reduction <maximumf>, %59, %cst_29 [1] : vector<16x32xf32> to vector<16xf32>
    %65 = vector.shape_cast %64 : vector<16xf32> to vector<16x1xf32>
    %cst_30 = arith.constant dense<0xFF800000> : vector<16xf32>
    %66 = vector.multi_reduction <maximumf>, %63, %cst_30 [1] : vector<16x512xf32> to vector<16xf32>
    %67 = vector.shape_cast %66 : vector<16xf32> to vector<16x1xf32>
    %68 = arith.maximumf %65, %67 : vector<16x1xf32>
    %c0_31 = arith.constant 0 : index
    %c4 = arith.constant 4 : index
    %69 = vector.load %arg6[%c0_31, %c4] : memref<16x32xf32, #tpu.memory_space<vmem>>, vector<16x1xf32>
    tpu.vector_store %arg6[%c0_31, %c4], %68 {strides = array<i32>} : memref<16x32xf32, #tpu.memory_space<vmem>>, vector<16x1xf32>,
    %70 = vector.broadcast %68 : vector<16x1xf32> to vector<16x32xf32>
    %71 = arith.cmpf oge, %59, %70 : vector<16x32xf32>
    %cst_32 = arith.constant 0xFF800000 : f32
    %72 = vector.broadcast %cst_32 : f32 to vector<16x32xf32>
    %73 = arith.select %71, %72, %59 : vector<16x32xi1>, vector<16x32xf32>
    %74 = vector.broadcast %68 : vector<16x1xf32> to vector<16x512xf32>
    %75 = arith.cmpf oge, %63, %74 : vector<16x512xf32>
    %cst_33 = arith.constant 0xFF800000 : f32
    %76 = vector.broadcast %cst_33 : f32 to vector<16x512xf32>
    %77 = arith.select %75, %76, %63 : vector<16x512xi1>, vector<16x512xf32>
    %cst_34 = arith.constant dense<0xFF800000> : vector<16xf32>
    %78 = vector.multi_reduction <maximumf>, %73, %cst_34 [1] : vector<16x32xf32> to vector<16xf32>
    %79 = vector.shape_cast %78 : vector<16xf32> to vector<16x1xf32>
    %cst_35 = arith.constant dense<0xFF800000> : vector<16xf32>
    %80 = vector.multi_reduction <maximumf>, %77, %cst_35 [1] : vector<16x512xf32> to vector<16xf32>
    %81 = vector.shape_cast %80 : vector<16xf32> to vector<16x1xf32>
    %82 = arith.maximumf %79, %81 : vector<16x1xf32>
    %c0_36 = arith.constant 0 : index
    %c5 = arith.constant 5 : index
    %83 = vector.load %arg6[%c0_36, %c5] : memref<16x32xf32, #tpu.memory_space<vmem>>, vector<16x1xf32>
    tpu.vector_store %arg6[%c0_36, %c5], %82 {strides = array<i32>} : memref<16x32xf32, #tpu.memory_space<vmem>>, vector<16x1xf32>,
    %84 = vector.broadcast %82 : vector<16x1xf32> to vector<16x32xf32>
    %85 = arith.cmpf oge, %73, %84 : vector<16x32xf32>
    %cst_37 = arith.constant 0xFF800000 : f32
    %86 = vector.broadcast %cst_37 : f32 to vector<16x32xf32>
    %87 = arith.select %85, %86, %73 : vector<16x32xi1>, vector<16x32xf32>
    %88 = vector.broadcast %82 : vector<16x1xf32> to vector<16x512xf32>
    %89 = arith.cmpf oge, %77, %88 : vector<16x512xf32>
    %cst_38 = arith.constant 0xFF800000 : f32
    %90 = vector.broadcast %cst_38 : f32 to vector<16x512xf32>
    %91 = arith.select %89, %90, %77 : vector<16x512xi1>, vector<16x512xf32>
    %cst_39 = arith.constant dense<0xFF800000> : vector<16xf32>
    %92 = vector.multi_reduction <maximumf>, %87, %cst_39 [1] : vector<16x32xf32> to vector<16xf32>
    %93 = vector.shape_cast %92 : vector<16xf32> to vector<16x1xf32>
    %cst_40 = arith.constant dense<0xFF800000> : vector<16xf32>
    %94 = vector.multi_reduction <maximumf>, %91, %cst_40 [1] : vector<16x512xf32> to vector<16xf32>
    %95 = vector.shape_cast %94 : vector<16xf32> to vector<16x1xf32>
    %96 = arith.maximumf %93, %95 : vector<16x1xf32>
    %c0_41 = arith.constant 0 : index
    %c6 = arith.constant 6 : index
    %97 = vector.load %arg6[%c0_41, %c6] : memref<16x32xf32, #tpu.memory_space<vmem>>, vector<16x1xf32>
    tpu.vector_store %arg6[%c0_41, %c6], %96 {strides = array<i32>} : memref<16x32xf32, #tpu.memory_space<vmem>>, vector<16x1xf32>,
    %98 = vector.broadcast %96 : vector<16x1xf32> to vector<16x32xf32>
    %99 = arith.cmpf oge, %87, %98 : vector<16x32xf32>
    %cst_42 = arith.constant 0xFF800000 : f32
    %100 = vector.broadcast %cst_42 : f32 to vector<16x32xf32>
    %101 = arith.select %99, %100, %87 : vector<16x32xi1>, vector<16x32xf32>
    %102 = vector.broadcast %96 : vector<16x1xf32> to vector<16x512xf32>
    %103 = arith.cmpf oge, %91, %102 : vector<16x512xf32>
    %cst_43 = arith.constant 0xFF800000 : f32
    %104 = vector.broadcast %cst_43 : f32 to vector<16x512xf32>
    %105 = arith.select %103, %104, %91 : vector<16x512xi1>, vector<16x512xf32>
    %cst_44 = arith.constant dense<0xFF800000> : vector<16xf32>
    %106 = vector.multi_reduction <maximumf>, %101, %cst_44 [1] : vector<16x32xf32> to vector<16xf32>
    %107 = vector.shape_cast %106 : vector<16xf32> to vector<16x1xf32>
    %cst_45 = arith.constant dense<0xFF800000> : vector<16xf32>
    %108 = vector.multi_reduction <maximumf>, %105, %cst_45 [1] : vector<16x512xf32> to vector<16xf32>
    %109 = vector.shape_cast %108 : vector<16xf32> to vector<16x1xf32>
    %110 = arith.maximumf %107, %109 : vector<16x1xf32>
    %c0_46 = arith.constant 0 : index
    %c7 = arith.constant 7 : index
    %111 = vector.load %arg6[%c0_46, %c7] : memref<16x32xf32, #tpu.memory_space<vmem>>, vector<16x1xf32>
    tpu.vector_store %arg6[%c0_46, %c7], %110 {strides = array<i32>} : memref<16x32xf32, #tpu.memory_space<vmem>>, vector<16x1xf32>,
    %112 = vector.broadcast %110 : vector<16x1xf32> to vector<16x32xf32>
    %113 = arith.cmpf oge, %101, %112 : vector<16x32xf32>
    %cst_47 = arith.constant 0xFF800000 : f32
    %114 = vector.broadcast %cst_47 : f32 to vector<16x32xf32>
    %115 = arith.select %113, %114, %101 : vector<16x32xi1>, vector<16x32xf32>
    %116 = vector.broadcast %110 : vector<16x1xf32> to vector<16x512xf32>
    %117 = arith.cmpf oge, %105, %116 : vector<16x512xf32>
    %cst_48 = arith.constant 0xFF800000 : f32
    %118 = vector.broadcast %cst_48 : f32 to vector<16x512xf32>
    %119 = arith.select %117, %118, %105 : vector<16x512xi1>, vector<16x512xf32>
    %cst_49 = arith.constant dense<0xFF800000> : vector<16xf32>
    %120 = vector.multi_reduction <maximumf>, %115, %cst_49 [1] : vector<16x32xf32> to vector<16xf32>
    %121 = vector.shape_cast %120 : vector<16xf32> to vector<16x1xf32>
    %cst_50 = arith.constant dense<0xFF800000> : vector<16xf32>
    %122 = vector.multi_reduction <maximumf>, %119, %cst_50 [1] : vector<16x512xf32> to vector<16xf32>
    %123 = vector.shape_cast %122 : vector<16xf32> to vector<16x1xf32>
    %124 = arith.maximumf %121, %123 : vector<16x1xf32>
    %c0_51 = arith.constant 0 : index
    %c8 = arith.constant 8 : index
    %125 = vector.load %arg6[%c0_51, %c8] : memref<16x32xf32, #tpu.memory_space<vmem>>, vector<16x1xf32>
    tpu.vector_store %arg6[%c0_51, %c8], %124 {strides = array<i32>} : memref<16x32xf32, #tpu.memory_space<vmem>>, vector<16x1xf32>,
    %126 = vector.broadcast %124 : vector<16x1xf32> to vector<16x32xf32>
    %127 = arith.cmpf oge, %115, %126 : vector<16x32xf32>
    %cst_52 = arith.constant 0xFF800000 : f32
    %128 = vector.broadcast %cst_52 : f32 to vector<16x32xf32>
    %129 = arith.select %127, %128, %115 : vector<16x32xi1>, vector<16x32xf32>
    %130 = vector.broadcast %124 : vector<16x1xf32> to vector<16x512xf32>
    %131 = arith.cmpf oge, %119, %130 : vector<16x512xf32>
    %cst_53 = arith.constant 0xFF800000 : f32
    %132 = vector.broadcast %cst_53 : f32 to vector<16x512xf32>
    %133 = arith.select %131, %132, %119 : vector<16x512xi1>, vector<16x512xf32>
    %cst_54 = arith.constant dense<0xFF800000> : vector<16xf32>
    %134 = vector.multi_reduction <maximumf>, %129, %cst_54 [1] : vector<16x32xf32> to vector<16xf32>
    %135 = vector.shape_cast %134 : vector<16xf32> to vector<16x1xf32>
    %cst_55 = arith.constant dense<0xFF800000> : vector<16xf32>
    %136 = vector.multi_reduction <maximumf>, %133, %cst_55 [1] : vector<16x512xf32> to vector<16xf32>
    %137 = vector.shape_cast %136 : vector<16xf32> to vector<16x1xf32>
    %138 = arith.maximumf %135, %137 : vector<16x1xf32>
    %c0_56 = arith.constant 0 : index
    %c9 = arith.constant 9 : index
    %139 = vector.load %arg6[%c0_56, %c9] : memref<16x32xf32, #tpu.memory_space<vmem>>, vector<16x1xf32>
    tpu.vector_store %arg6[%c0_56, %c9], %138 {strides = array<i32>} : memref<16x32xf32, #tpu.memory_space<vmem>>, vector<16x1xf32>,
    %140 = vector.broadcast %138 : vector<16x1xf32> to vector<16x32xf32>
    %141 = arith.cmpf oge, %129, %140 : vector<16x32xf32>
    %cst_57 = arith.constant 0xFF800000 : f32
    %142 = vector.broadcast %cst_57 : f32 to vector<16x32xf32>
    %143 = arith.select %141, %142, %129 : vector<16x32xi1>, vector<16x32xf32>
    %144 = vector.broadcast %138 : vector<16x1xf32> to vector<16x512xf32>
    %145 = arith.cmpf oge, %133, %144 : vector<16x512xf32>
    %cst_58 = arith.constant 0xFF800000 : f32
    %146 = vector.broadcast %cst_58 : f32 to vector<16x512xf32>
    %147 = arith.select %145, %146, %133 : vector<16x512xi1>, vector<16x512xf32>
    %cst_59 = arith.constant dense<0xFF800000> : vector<16xf32>
    %148 = vector.multi_reduction <maximumf>, %143, %cst_59 [1] : vector<16x32xf32> to vector<16xf32>
    %149 = vector.shape_cast %148 : vector<16xf32> to vector<16x1xf32>
    %cst_60 = arith.constant dense<0xFF800000> : vector<16xf32>
    %150 = vector.multi_reduction <maximumf>, %147, %cst_60 [1] : vector<16x512xf32> to vector<16xf32>
    %151 = vector.shape_cast %150 : vector<16xf32> to vector<16x1xf32>
    %152 = arith.maximumf %149, %151 : vector<16x1xf32>
    %c0_61 = arith.constant 0 : index
    %c10 = arith.constant 10 : index
    %153 = vector.load %arg6[%c0_61, %c10] : memref<16x32xf32, #tpu.memory_space<vmem>>, vector<16x1xf32>
    tpu.vector_store %arg6[%c0_61, %c10], %152 {strides = array<i32>} : memref<16x32xf32, #tpu.memory_space<vmem>>, vector<16x1xf32>,
    %154 = vector.broadcast %152 : vector<16x1xf32> to vector<16x32xf32>
    %155 = arith.cmpf oge, %143, %154 : vector<16x32xf32>
    %cst_62 = arith.constant 0xFF800000 : f32
    %156 = vector.broadcast %cst_62 : f32 to vector<16x32xf32>
    %157 = arith.select %155, %156, %143 : vector<16x32xi1>, vector<16x32xf32>
    %158 = vector.broadcast %152 : vector<16x1xf32> to vector<16x512xf32>
    %159 = arith.cmpf oge, %147, %158 : vector<16x512xf32>
    %cst_63 = arith.constant 0xFF800000 : f32
    %160 = vector.broadcast %cst_63 : f32 to vector<16x512xf32>
    %161 = arith.select %159, %160, %147 : vector<16x512xi1>, vector<16x512xf32>
    %cst_64 = arith.constant dense<0xFF800000> : vector<16xf32>
    %162 = vector.multi_reduction <maximumf>, %157, %cst_64 [1] : vector<16x32xf32> to vector<16xf32>
    %163 = vector.shape_cast %162 : vector<16xf32> to vector<16x1xf32>
    %cst_65 = arith.constant dense<0xFF800000> : vector<16xf32>
    %164 = vector.multi_reduction <maximumf>, %161, %cst_65 [1] : vector<16x512xf32> to vector<16xf32>
    %165 = vector.shape_cast %164 : vector<16xf32> to vector<16x1xf32>
    %166 = arith.maximumf %163, %165 : vector<16x1xf32>
    %c0_66 = arith.constant 0 : index
    %c11 = arith.constant 11 : index
    %167 = vector.load %arg6[%c0_66, %c11] : memref<16x32xf32, #tpu.memory_space<vmem>>, vector<16x1xf32>
    tpu.vector_store %arg6[%c0_66, %c11], %166 {strides = array<i32>} : memref<16x32xf32, #tpu.memory_space<vmem>>, vector<16x1xf32>,
    %168 = vector.broadcast %166 : vector<16x1xf32> to vector<16x32xf32>
    %169 = arith.cmpf oge, %157, %168 : vector<16x32xf32>
    %cst_67 = arith.constant 0xFF800000 : f32
    %170 = vector.broadcast %cst_67 : f32 to vector<16x32xf32>
    %171 = arith.select %169, %170, %157 : vector<16x32xi1>, vector<16x32xf32>
    %172 = vector.broadcast %166 : vector<16x1xf32> to vector<16x512xf32>
    %173 = arith.cmpf oge, %161, %172 : vector<16x512xf32>
    %cst_68 = arith.constant 0xFF800000 : f32
    %174 = vector.broadcast %cst_68 : f32 to vector<16x512xf32>
    %175 = arith.select %173, %174, %161 : vector<16x512xi1>, vector<16x512xf32>
    %cst_69 = arith.constant dense<0xFF800000> : vector<16xf32>
    %176 = vector.multi_reduction <maximumf>, %171, %cst_69 [1] : vector<16x32xf32> to vector<16xf32>
    %177 = vector.shape_cast %176 : vector<16xf32> to vector<16x1xf32>
    %cst_70 = arith.constant dense<0xFF800000> : vector<16xf32>
    %178 = vector.multi_reduction <maximumf>, %175, %cst_70 [1] : vector<16x512xf32> to vector<16xf32>
    %179 = vector.shape_cast %178 : vector<16xf32> to vector<16x1xf32>
    %180 = arith.maximumf %177, %179 : vector<16x1xf32>
    %c0_71 = arith.constant 0 : index
    %c12 = arith.constant 12 : index
    %181 = vector.load %arg6[%c0_71, %c12] : memref<16x32xf32, #tpu.memory_space<vmem>>, vector<16x1xf32>
    tpu.vector_store %arg6[%c0_71, %c12], %180 {strides = array<i32>} : memref<16x32xf32, #tpu.memory_space<vmem>>, vector<16x1xf32>,
    %182 = vector.broadcast %180 : vector<16x1xf32> to vector<16x32xf32>
    %183 = arith.cmpf oge, %171, %182 : vector<16x32xf32>
    %cst_72 = arith.constant 0xFF800000 : f32
    %184 = vector.broadcast %cst_72 : f32 to vector<16x32xf32>
    %185 = arith.select %183, %184, %171 : vector<16x32xi1>, vector<16x32xf32>
    %186 = vector.broadcast %180 : vector<16x1xf32> to vector<16x512xf32>
    %187 = arith.cmpf oge, %175, %186 : vector<16x512xf32>
    %cst_73 = arith.constant 0xFF800000 : f32
    %188 = vector.broadcast %cst_73 : f32 to vector<16x512xf32>
    %189 = arith.select %187, %188, %175 : vector<16x512xi1>, vector<16x512xf32>
    %cst_74 = arith.constant dense<0xFF800000> : vector<16xf32>
    %190 = vector.multi_reduction <maximumf>, %185, %cst_74 [1] : vector<16x32xf32> to vector<16xf32>
    %191 = vector.shape_cast %190 : vector<16xf32> to vector<16x1xf32>
    %cst_75 = arith.constant dense<0xFF800000> : vector<16xf32>
    %192 = vector.multi_reduction <maximumf>, %189, %cst_75 [1] : vector<16x512xf32> to vector<16xf32>
    %193 = vector.shape_cast %192 : vector<16xf32> to vector<16x1xf32>
    %194 = arith.maximumf %191, %193 : vector<16x1xf32>
    %c0_76 = arith.constant 0 : index
    %c13 = arith.constant 13 : index
    %195 = vector.load %arg6[%c0_76, %c13] : memref<16x32xf32, #tpu.memory_space<vmem>>, vector<16x1xf32>
    tpu.vector_store %arg6[%c0_76, %c13], %194 {strides = array<i32>} : memref<16x32xf32, #tpu.memory_space<vmem>>, vector<16x1xf32>,
    %196 = vector.broadcast %194 : vector<16x1xf32> to vector<16x32xf32>
    %197 = arith.cmpf oge, %185, %196 : vector<16x32xf32>
    %cst_77 = arith.constant 0xFF800000 : f32
    %198 = vector.broadcast %cst_77 : f32 to vector<16x32xf32>
    %199 = arith.select %197, %198, %185 : vector<16x32xi1>, vector<16x32xf32>
    %200 = vector.broadcast %194 : vector<16x1xf32> to vector<16x512xf32>
    %201 = arith.cmpf oge, %189, %200 : vector<16x512xf32>
    %cst_78 = arith.constant 0xFF800000 : f32
    %202 = vector.broadcast %cst_78 : f32 to vector<16x512xf32>
    %203 = arith.select %201, %202, %189 : vector<16x512xi1>, vector<16x512xf32>
    %cst_79 = arith.constant dense<0xFF800000> : vector<16xf32>
    %204 = vector.multi_reduction <maximumf>, %199, %cst_79 [1] : vector<16x32xf32> to vector<16xf32>
    %205 = vector.shape_cast %204 : vector<16xf32> to vector<16x1xf32>
    %cst_80 = arith.constant dense<0xFF800000> : vector<16xf32>
    %206 = vector.multi_reduction <maximumf>, %203, %cst_80 [1] : vector<16x512xf32> to vector<16xf32>
    %207 = vector.shape_cast %206 : vector<16xf32> to vector<16x1xf32>
    %208 = arith.maximumf %205, %207 : vector<16x1xf32>
    %c0_81 = arith.constant 0 : index
    %c14 = arith.constant 14 : index
    %209 = vector.load %arg6[%c0_81, %c14] : memref<16x32xf32, #tpu.memory_space<vmem>>, vector<16x1xf32>
    tpu.vector_store %arg6[%c0_81, %c14], %208 {strides = array<i32>} : memref<16x32xf32, #tpu.memory_space<vmem>>, vector<16x1xf32>,
    %210 = vector.broadcast %208 : vector<16x1xf32> to vector<16x32xf32>
    %211 = arith.cmpf oge, %199, %210 : vector<16x32xf32>
    %cst_82 = arith.constant 0xFF800000 : f32
    %212 = vector.broadcast %cst_82 : f32 to vector<16x32xf32>
    %213 = arith.select %211, %212, %199 : vector<16x32xi1>, vector<16x32xf32>
    %214 = vector.broadcast %208 : vector<16x1xf32> to vector<16x512xf32>
    %215 = arith.cmpf oge, %203, %214 : vector<16x512xf32>
    %cst_83 = arith.constant 0xFF800000 : f32
    %216 = vector.broadcast %cst_83 : f32 to vector<16x512xf32>
    %217 = arith.select %215, %216, %203 : vector<16x512xi1>, vector<16x512xf32>
    %cst_84 = arith.constant dense<0xFF800000> : vector<16xf32>
    %218 = vector.multi_reduction <maximumf>, %213, %cst_84 [1] : vector<16x32xf32> to vector<16xf32>
    %219 = vector.shape_cast %218 : vector<16xf32> to vector<16x1xf32>
    %cst_85 = arith.constant dense<0xFF800000> : vector<16xf32>
    %220 = vector.multi_reduction <maximumf>, %217, %cst_85 [1] : vector<16x512xf32> to vector<16xf32>
    %221 = vector.shape_cast %220 : vector<16xf32> to vector<16x1xf32>
    %222 = arith.maximumf %219, %221 : vector<16x1xf32>
    %c0_86 = arith.constant 0 : index
    %c15 = arith.constant 15 : index
    %223 = vector.load %arg6[%c0_86, %c15] : memref<16x32xf32, #tpu.memory_space<vmem>>, vector<16x1xf32>
    tpu.vector_store %arg6[%c0_86, %c15], %222 {strides = array<i32>} : memref<16x32xf32, #tpu.memory_space<vmem>>, vector<16x1xf32>,
    %224 = vector.broadcast %222 : vector<16x1xf32> to vector<16x32xf32>
    %225 = arith.cmpf oge, %213, %224 : vector<16x32xf32>
    %cst_87 = arith.constant 0xFF800000 : f32
    %226 = vector.broadcast %cst_87 : f32 to vector<16x32xf32>
    %227 = arith.select %225, %226, %213 : vector<16x32xi1>, vector<16x32xf32>
    %228 = vector.broadcast %222 : vector<16x1xf32> to vector<16x512xf32>
    %229 = arith.cmpf oge, %217, %228 : vector<16x512xf32>
    %cst_88 = arith.constant 0xFF800000 : f32
    %230 = vector.broadcast %cst_88 : f32 to vector<16x512xf32>
    %231 = arith.select %229, %230, %217 : vector<16x512xi1>, vector<16x512xf32>
    %cst_89 = arith.constant dense<0xFF800000> : vector<16xf32>
    %232 = vector.multi_reduction <maximumf>, %227, %cst_89 [1] : vector<16x32xf32> to vector<16xf32>
    %233 = vector.shape_cast %232 : vector<16xf32> to vector<16x1xf32>
    %cst_90 = arith.constant dense<0xFF800000> : vector<16xf32>
    %234 = vector.multi_reduction <maximumf>, %231, %cst_90 [1] : vector<16x512xf32> to vector<16xf32>
    %235 = vector.shape_cast %234 : vector<16xf32> to vector<16x1xf32>
    %236 = arith.maximumf %233, %235 : vector<16x1xf32>
    %c0_91 = arith.constant 0 : index
    %c16 = arith.constant 16 : index
    %237 = vector.load %arg6[%c0_91, %c16] : memref<16x32xf32, #tpu.memory_space<vmem>>, vector<16x1xf32>
    tpu.vector_store %arg6[%c0_91, %c16], %236 {strides = array<i32>} : memref<16x32xf32, #tpu.memory_space<vmem>>, vector<16x1xf32>,
    %238 = vector.broadcast %236 : vector<16x1xf32> to vector<16x32xf32>
    %239 = arith.cmpf oge, %227, %238 : vector<16x32xf32>
    %cst_92 = arith.constant 0xFF800000 : f32
    %240 = vector.broadcast %cst_92 : f32 to vector<16x32xf32>
    %241 = arith.select %239, %240, %227 : vector<16x32xi1>, vector<16x32xf32>
    %242 = vector.broadcast %236 : vector<16x1xf32> to vector<16x512xf32>
    %243 = arith.cmpf oge, %231, %242 : vector<16x512xf32>
    %cst_93 = arith.constant 0xFF800000 : f32
    %244 = vector.broadcast %cst_93 : f32 to vector<16x512xf32>
    %245 = arith.select %243, %244, %231 : vector<16x512xi1>, vector<16x512xf32>
    %cst_94 = arith.constant dense<0xFF800000> : vector<16xf32>
    %246 = vector.multi_reduction <maximumf>, %241, %cst_94 [1] : vector<16x32xf32> to vector<16xf32>
    %247 = vector.shape_cast %246 : vector<16xf32> to vector<16x1xf32>
    %cst_95 = arith.constant dense<0xFF800000> : vector<16xf32>
    %248 = vector.multi_reduction <maximumf>, %245, %cst_95 [1] : vector<16x512xf32> to vector<16xf32>
    %249 = vector.shape_cast %248 : vector<16xf32> to vector<16x1xf32>
    %250 = arith.maximumf %247, %249 : vector<16x1xf32>
    %c0_96 = arith.constant 0 : index
    %c17 = arith.constant 17 : index
    %251 = vector.load %arg6[%c0_96, %c17] : memref<16x32xf32, #tpu.memory_space<vmem>>, vector<16x1xf32>
    tpu.vector_store %arg6[%c0_96, %c17], %250 {strides = array<i32>} : memref<16x32xf32, #tpu.memory_space<vmem>>, vector<16x1xf32>,
    %252 = vector.broadcast %250 : vector<16x1xf32> to vector<16x32xf32>
    %253 = arith.cmpf oge, %241, %252 : vector<16x32xf32>
    %cst_97 = arith.constant 0xFF800000 : f32
    %254 = vector.broadcast %cst_97 : f32 to vector<16x32xf32>
    %255 = arith.select %253, %254, %241 : vector<16x32xi1>, vector<16x32xf32>
    %256 = vector.broadcast %250 : vector<16x1xf32> to vector<16x512xf32>
    %257 = arith.cmpf oge, %245, %256 : vector<16x512xf32>
    %cst_98 = arith.constant 0xFF800000 : f32
    %258 = vector.broadcast %cst_98 : f32 to vector<16x512xf32>
    %259 = arith.select %257, %258, %245 : vector<16x512xi1>, vector<16x512xf32>
    %cst_99 = arith.constant dense<0xFF800000> : vector<16xf32>
    %260 = vector.multi_reduction <maximumf>, %255, %cst_99 [1] : vector<16x32xf32> to vector<16xf32>
    %261 = vector.shape_cast %260 : vector<16xf32> to vector<16x1xf32>
    %cst_100 = arith.constant dense<0xFF800000> : vector<16xf32>
    %262 = vector.multi_reduction <maximumf>, %259, %cst_100 [1] : vector<16x512xf32> to vector<16xf32>
    %263 = vector.shape_cast %262 : vector<16xf32> to vector<16x1xf32>
    %264 = arith.maximumf %261, %263 : vector<16x1xf32>
    %c0_101 = arith.constant 0 : index
    %c18 = arith.constant 18 : index
    %265 = vector.load %arg6[%c0_101, %c18] : memref<16x32xf32, #tpu.memory_space<vmem>>, vector<16x1xf32>
    tpu.vector_store %arg6[%c0_101, %c18], %264 {strides = array<i32>} : memref<16x32xf32, #tpu.memory_space<vmem>>, vector<16x1xf32>,
    %266 = vector.broadcast %264 : vector<16x1xf32> to vector<16x32xf32>
    %267 = arith.cmpf oge, %255, %266 : vector<16x32xf32>
    %cst_102 = arith.constant 0xFF800000 : f32
    %268 = vector.broadcast %cst_102 : f32 to vector<16x32xf32>
    %269 = arith.select %267, %268, %255 : vector<16x32xi1>, vector<16x32xf32>
    %270 = vector.broadcast %264 : vector<16x1xf32> to vector<16x512xf32>
    %271 = arith.cmpf oge, %259, %270 : vector<16x512xf32>
    %cst_103 = arith.constant 0xFF800000 : f32
    %272 = vector.broadcast %cst_103 : f32 to vector<16x512xf32>
    %273 = arith.select %271, %272, %259 : vector<16x512xi1>, vector<16x512xf32>
    %cst_104 = arith.constant dense<0xFF800000> : vector<16xf32>
    %274 = vector.multi_reduction <maximumf>, %269, %cst_104 [1] : vector<16x32xf32> to vector<16xf32>
    %275 = vector.shape_cast %274 : vector<16xf32> to vector<16x1xf32>
    %cst_105 = arith.constant dense<0xFF800000> : vector<16xf32>
    %276 = vector.multi_reduction <maximumf>, %273, %cst_105 [1] : vector<16x512xf32> to vector<16xf32>
    %277 = vector.shape_cast %276 : vector<16xf32> to vector<16x1xf32>
    %278 = arith.maximumf %275, %277 : vector<16x1xf32>
    %c0_106 = arith.constant 0 : index
    %c19 = arith.constant 19 : index
    %279 = vector.load %arg6[%c0_106, %c19] : memref<16x32xf32, #tpu.memory_space<vmem>>, vector<16x1xf32>
    tpu.vector_store %arg6[%c0_106, %c19], %278 {strides = array<i32>} : memref<16x32xf32, #tpu.memory_space<vmem>>, vector<16x1xf32>,
    %280 = vector.broadcast %278 : vector<16x1xf32> to vector<16x32xf32>
    %281 = arith.cmpf oge, %269, %280 : vector<16x32xf32>
    %cst_107 = arith.constant 0xFF800000 : f32
    %282 = vector.broadcast %cst_107 : f32 to vector<16x32xf32>
    %283 = arith.select %281, %282, %269 : vector<16x32xi1>, vector<16x32xf32>
    %284 = vector.broadcast %278 : vector<16x1xf32> to vector<16x512xf32>
    %285 = arith.cmpf oge, %273, %284 : vector<16x512xf32>
    %cst_108 = arith.constant 0xFF800000 : f32
    %286 = vector.broadcast %cst_108 : f32 to vector<16x512xf32>
    %287 = arith.select %285, %286, %273 : vector<16x512xi1>, vector<16x512xf32>
    %cst_109 = arith.constant dense<0xFF800000> : vector<16xf32>
    %288 = vector.multi_reduction <maximumf>, %283, %cst_109 [1] : vector<16x32xf32> to vector<16xf32>
    %289 = vector.shape_cast %288 : vector<16xf32> to vector<16x1xf32>
    %cst_110 = arith.constant dense<0xFF800000> : vector<16xf32>
    %290 = vector.multi_reduction <maximumf>, %287, %cst_110 [1] : vector<16x512xf32> to vector<16xf32>
    %291 = vector.shape_cast %290 : vector<16xf32> to vector<16x1xf32>
    %292 = arith.maximumf %289, %291 : vector<16x1xf32>
    %c0_111 = arith.constant 0 : index
    %c20 = arith.constant 20 : index
    %293 = vector.load %arg6[%c0_111, %c20] : memref<16x32xf32, #tpu.memory_space<vmem>>, vector<16x1xf32>
    tpu.vector_store %arg6[%c0_111, %c20], %292 {strides = array<i32>} : memref<16x32xf32, #tpu.memory_space<vmem>>, vector<16x1xf32>,
    %294 = vector.broadcast %292 : vector<16x1xf32> to vector<16x32xf32>
    %295 = arith.cmpf oge, %283, %294 : vector<16x32xf32>
    %cst_112 = arith.constant 0xFF800000 : f32
    %296 = vector.broadcast %cst_112 : f32 to vector<16x32xf32>
    %297 = arith.select %295, %296, %283 : vector<16x32xi1>, vector<16x32xf32>
    %298 = vector.broadcast %292 : vector<16x1xf32> to vector<16x512xf32>
    %299 = arith.cmpf oge, %287, %298 : vector<16x512xf32>
    %cst_113 = arith.constant 0xFF800000 : f32
    %300 = vector.broadcast %cst_113 : f32 to vector<16x512xf32>
    %301 = arith.select %299, %300, %287 : vector<16x512xi1>, vector<16x512xf32>
    %cst_114 = arith.constant dense<0xFF800000> : vector<16xf32>
    %302 = vector.multi_reduction <maximumf>, %297, %cst_114 [1] : vector<16x32xf32> to vector<16xf32>
    %303 = vector.shape_cast %302 : vector<16xf32> to vector<16x1xf32>
    %cst_115 = arith.constant dense<0xFF800000> : vector<16xf32>
    %304 = vector.multi_reduction <maximumf>, %301, %cst_115 [1] : vector<16x512xf32> to vector<16xf32>
    %305 = vector.shape_cast %304 : vector<16xf32> to vector<16x1xf32>
    %306 = arith.maximumf %303, %305 : vector<16x1xf32>
    %c0_116 = arith.constant 0 : index
    %c21 = arith.constant 21 : index
    %307 = vector.load %arg6[%c0_116, %c21] : memref<16x32xf32, #tpu.memory_space<vmem>>, vector<16x1xf32>
    tpu.vector_store %arg6[%c0_116, %c21], %306 {strides = array<i32>} : memref<16x32xf32, #tpu.memory_space<vmem>>, vector<16x1xf32>,
    %308 = vector.broadcast %306 : vector<16x1xf32> to vector<16x32xf32>
    %309 = arith.cmpf oge, %297, %308 : vector<16x32xf32>
    %cst_117 = arith.constant 0xFF800000 : f32
    %310 = vector.broadcast %cst_117 : f32 to vector<16x32xf32>
    %311 = arith.select %309, %310, %297 : vector<16x32xi1>, vector<16x32xf32>
    %312 = vector.broadcast %306 : vector<16x1xf32> to vector<16x512xf32>
    %313 = arith.cmpf oge, %301, %312 : vector<16x512xf32>
    %cst_118 = arith.constant 0xFF800000 : f32
    %314 = vector.broadcast %cst_118 : f32 to vector<16x512xf32>
    %315 = arith.select %313, %314, %301 : vector<16x512xi1>, vector<16x512xf32>
    %cst_119 = arith.constant dense<0xFF800000> : vector<16xf32>
    %316 = vector.multi_reduction <maximumf>, %311, %cst_119 [1] : vector<16x32xf32> to vector<16xf32>
    %317 = vector.shape_cast %316 : vector<16xf32> to vector<16x1xf32>
    %cst_120 = arith.constant dense<0xFF800000> : vector<16xf32>
    %318 = vector.multi_reduction <maximumf>, %315, %cst_120 [1] : vector<16x512xf32> to vector<16xf32>
    %319 = vector.shape_cast %318 : vector<16xf32> to vector<16x1xf32>
    %320 = arith.maximumf %317, %319 : vector<16x1xf32>
    %c0_121 = arith.constant 0 : index
    %c22 = arith.constant 22 : index
    %321 = vector.load %arg6[%c0_121, %c22] : memref<16x32xf32, #tpu.memory_space<vmem>>, vector<16x1xf32>
    tpu.vector_store %arg6[%c0_121, %c22], %320 {strides = array<i32>} : memref<16x32xf32, #tpu.memory_space<vmem>>, vector<16x1xf32>,
    %322 = vector.broadcast %320 : vector<16x1xf32> to vector<16x32xf32>
    %323 = arith.cmpf oge, %311, %322 : vector<16x32xf32>
    %cst_122 = arith.constant 0xFF800000 : f32
    %324 = vector.broadcast %cst_122 : f32 to vector<16x32xf32>
    %325 = arith.select %323, %324, %311 : vector<16x32xi1>, vector<16x32xf32>
    %326 = vector.broadcast %320 : vector<16x1xf32> to vector<16x512xf32>
    %327 = arith.cmpf oge, %315, %326 : vector<16x512xf32>
    %cst_123 = arith.constant 0xFF800000 : f32
    %328 = vector.broadcast %cst_123 : f32 to vector<16x512xf32>
    %329 = arith.select %327, %328, %315 : vector<16x512xi1>, vector<16x512xf32>
    %cst_124 = arith.constant dense<0xFF800000> : vector<16xf32>
    %330 = vector.multi_reduction <maximumf>, %325, %cst_124 [1] : vector<16x32xf32> to vector<16xf32>
    %331 = vector.shape_cast %330 : vector<16xf32> to vector<16x1xf32>
    %cst_125 = arith.constant dense<0xFF800000> : vector<16xf32>
    %332 = vector.multi_reduction <maximumf>, %329, %cst_125 [1] : vector<16x512xf32> to vector<16xf32>
    %333 = vector.shape_cast %332 : vector<16xf32> to vector<16x1xf32>
    %334 = arith.maximumf %331, %333 : vector<16x1xf32>
    %c0_126 = arith.constant 0 : index
    %c23 = arith.constant 23 : index
    %335 = vector.load %arg6[%c0_126, %c23] : memref<16x32xf32, #tpu.memory_space<vmem>>, vector<16x1xf32>
    tpu.vector_store %arg6[%c0_126, %c23], %334 {strides = array<i32>} : memref<16x32xf32, #tpu.memory_space<vmem>>, vector<16x1xf32>,
    %336 = vector.broadcast %334 : vector<16x1xf32> to vector<16x32xf32>
    %337 = arith.cmpf oge, %325, %336 : vector<16x32xf32>
    %cst_127 = arith.constant 0xFF800000 : f32
    %338 = vector.broadcast %cst_127 : f32 to vector<16x32xf32>
    %339 = arith.select %337, %338, %325 : vector<16x32xi1>, vector<16x32xf32>
    %340 = vector.broadcast %334 : vector<16x1xf32> to vector<16x512xf32>
    %341 = arith.cmpf oge, %329, %340 : vector<16x512xf32>
    %cst_128 = arith.constant 0xFF800000 : f32
    %342 = vector.broadcast %cst_128 : f32 to vector<16x512xf32>
    %343 = arith.select %341, %342, %329 : vector<16x512xi1>, vector<16x512xf32>
    %cst_129 = arith.constant dense<0xFF800000> : vector<16xf32>
    %344 = vector.multi_reduction <maximumf>, %339, %cst_129 [1] : vector<16x32xf32> to vector<16xf32>
    %345 = vector.shape_cast %344 : vector<16xf32> to vector<16x1xf32>
    %cst_130 = arith.constant dense<0xFF800000> : vector<16xf32>
    %346 = vector.multi_reduction <maximumf>, %343, %cst_130 [1] : vector<16x512xf32> to vector<16xf32>
    %347 = vector.shape_cast %346 : vector<16xf32> to vector<16x1xf32>
    %348 = arith.maximumf %345, %347 : vector<16x1xf32>
    %c0_131 = arith.constant 0 : index
    %c24 = arith.constant 24 : index
    %349 = vector.load %arg6[%c0_131, %c24] : memref<16x32xf32, #tpu.memory_space<vmem>>, vector<16x1xf32>
    tpu.vector_store %arg6[%c0_131, %c24], %348 {strides = array<i32>} : memref<16x32xf32, #tpu.memory_space<vmem>>, vector<16x1xf32>,
    %350 = vector.broadcast %348 : vector<16x1xf32> to vector<16x32xf32>
    %351 = arith.cmpf oge, %339, %350 : vector<16x32xf32>
    %cst_132 = arith.constant 0xFF800000 : f32
    %352 = vector.broadcast %cst_132 : f32 to vector<16x32xf32>
    %353 = arith.select %351, %352, %339 : vector<16x32xi1>, vector<16x32xf32>
    %354 = vector.broadcast %348 : vector<16x1xf32> to vector<16x512xf32>
    %355 = arith.cmpf oge, %343, %354 : vector<16x512xf32>
    %cst_133 = arith.constant 0xFF800000 : f32
    %356 = vector.broadcast %cst_133 : f32 to vector<16x512xf32>
    %357 = arith.select %355, %356, %343 : vector<16x512xi1>, vector<16x512xf32>
    %cst_134 = arith.constant dense<0xFF800000> : vector<16xf32>
    %358 = vector.multi_reduction <maximumf>, %353, %cst_134 [1] : vector<16x32xf32> to vector<16xf32>
    %359 = vector.shape_cast %358 : vector<16xf32> to vector<16x1xf32>
    %cst_135 = arith.constant dense<0xFF800000> : vector<16xf32>
    %360 = vector.multi_reduction <maximumf>, %357, %cst_135 [1] : vector<16x512xf32> to vector<16xf32>
    %361 = vector.shape_cast %360 : vector<16xf32> to vector<16x1xf32>
    %362 = arith.maximumf %359, %361 : vector<16x1xf32>
    %c0_136 = arith.constant 0 : index
    %c25 = arith.constant 25 : index
    %363 = vector.load %arg6[%c0_136, %c25] : memref<16x32xf32, #tpu.memory_space<vmem>>, vector<16x1xf32>
    tpu.vector_store %arg6[%c0_136, %c25], %362 {strides = array<i32>} : memref<16x32xf32, #tpu.memory_space<vmem>>, vector<16x1xf32>,
    %364 = vector.broadcast %362 : vector<16x1xf32> to vector<16x32xf32>
    %365 = arith.cmpf oge, %353, %364 : vector<16x32xf32>
    %cst_137 = arith.constant 0xFF800000 : f32
    %366 = vector.broadcast %cst_137 : f32 to vector<16x32xf32>
    %367 = arith.select %365, %366, %353 : vector<16x32xi1>, vector<16x32xf32>
    %368 = vector.broadcast %362 : vector<16x1xf32> to vector<16x512xf32>
    %369 = arith.cmpf oge, %357, %368 : vector<16x512xf32>
    %cst_138 = arith.constant 0xFF800000 : f32
    %370 = vector.broadcast %cst_138 : f32 to vector<16x512xf32>
    %371 = arith.select %369, %370, %357 : vector<16x512xi1>, vector<16x512xf32>
    %cst_139 = arith.constant dense<0xFF800000> : vector<16xf32>
    %372 = vector.multi_reduction <maximumf>, %367, %cst_139 [1] : vector<16x32xf32> to vector<16xf32>
    %373 = vector.shape_cast %372 : vector<16xf32> to vector<16x1xf32>
    %cst_140 = arith.constant dense<0xFF800000> : vector<16xf32>
    %374 = vector.multi_reduction <maximumf>, %371, %cst_140 [1] : vector<16x512xf32> to vector<16xf32>
    %375 = vector.shape_cast %374 : vector<16xf32> to vector<16x1xf32>
    %376 = arith.maximumf %373, %375 : vector<16x1xf32>
    %c0_141 = arith.constant 0 : index
    %c26 = arith.constant 26 : index
    %377 = vector.load %arg6[%c0_141, %c26] : memref<16x32xf32, #tpu.memory_space<vmem>>, vector<16x1xf32>
    tpu.vector_store %arg6[%c0_141, %c26], %376 {strides = array<i32>} : memref<16x32xf32, #tpu.memory_space<vmem>>, vector<16x1xf32>,
    %378 = vector.broadcast %376 : vector<16x1xf32> to vector<16x32xf32>
    %379 = arith.cmpf oge, %367, %378 : vector<16x32xf32>
    %cst_142 = arith.constant 0xFF800000 : f32
    %380 = vector.broadcast %cst_142 : f32 to vector<16x32xf32>
    %381 = arith.select %379, %380, %367 : vector<16x32xi1>, vector<16x32xf32>
    %382 = vector.broadcast %376 : vector<16x1xf32> to vector<16x512xf32>
    %383 = arith.cmpf oge, %371, %382 : vector<16x512xf32>
    %cst_143 = arith.constant 0xFF800000 : f32
    %384 = vector.broadcast %cst_143 : f32 to vector<16x512xf32>
    %385 = arith.select %383, %384, %371 : vector<16x512xi1>, vector<16x512xf32>
    %cst_144 = arith.constant dense<0xFF800000> : vector<16xf32>
    %386 = vector.multi_reduction <maximumf>, %381, %cst_144 [1] : vector<16x32xf32> to vector<16xf32>
    %387 = vector.shape_cast %386 : vector<16xf32> to vector<16x1xf32>
    %cst_145 = arith.constant dense<0xFF800000> : vector<16xf32>
    %388 = vector.multi_reduction <maximumf>, %385, %cst_145 [1] : vector<16x512xf32> to vector<16xf32>
    %389 = vector.shape_cast %388 : vector<16xf32> to vector<16x1xf32>
    %390 = arith.maximumf %387, %389 : vector<16x1xf32>
    %c0_146 = arith.constant 0 : index
    %c27 = arith.constant 27 : index
    %391 = vector.load %arg6[%c0_146, %c27] : memref<16x32xf32, #tpu.memory_space<vmem>>, vector<16x1xf32>
    tpu.vector_store %arg6[%c0_146, %c27], %390 {strides = array<i32>} : memref<16x32xf32, #tpu.memory_space<vmem>>, vector<16x1xf32>,
    %392 = vector.broadcast %390 : vector<16x1xf32> to vector<16x32xf32>
    %393 = arith.cmpf oge, %381, %392 : vector<16x32xf32>
    %cst_147 = arith.constant 0xFF800000 : f32
    %394 = vector.broadcast %cst_147 : f32 to vector<16x32xf32>
    %395 = arith.select %393, %394, %381 : vector<16x32xi1>, vector<16x32xf32>
    %396 = vector.broadcast %390 : vector<16x1xf32> to vector<16x512xf32>
    %397 = arith.cmpf oge, %385, %396 : vector<16x512xf32>
    %cst_148 = arith.constant 0xFF800000 : f32
    %398 = vector.broadcast %cst_148 : f32 to vector<16x512xf32>
    %399 = arith.select %397, %398, %385 : vector<16x512xi1>, vector<16x512xf32>
    %cst_149 = arith.constant dense<0xFF800000> : vector<16xf32>
    %400 = vector.multi_reduction <maximumf>, %395, %cst_149 [1] : vector<16x32xf32> to vector<16xf32>
    %401 = vector.shape_cast %400 : vector<16xf32> to vector<16x1xf32>
    %cst_150 = arith.constant dense<0xFF800000> : vector<16xf32>
    %402 = vector.multi_reduction <maximumf>, %399, %cst_150 [1] : vector<16x512xf32> to vector<16xf32>
    %403 = vector.shape_cast %402 : vector<16xf32> to vector<16x1xf32>
    %404 = arith.maximumf %401, %403 : vector<16x1xf32>
    %c0_151 = arith.constant 0 : index
    %c28 = arith.constant 28 : index
    %405 = vector.load %arg6[%c0_151, %c28] : memref<16x32xf32, #tpu.memory_space<vmem>>, vector<16x1xf32>
    tpu.vector_store %arg6[%c0_151, %c28], %404 {strides = array<i32>} : memref<16x32xf32, #tpu.memory_space<vmem>>, vector<16x1xf32>,
    %406 = vector.broadcast %404 : vector<16x1xf32> to vector<16x32xf32>
    %407 = arith.cmpf oge, %395, %406 : vector<16x32xf32>
    %cst_152 = arith.constant 0xFF800000 : f32
    %408 = vector.broadcast %cst_152 : f32 to vector<16x32xf32>
    %409 = arith.select %407, %408, %395 : vector<16x32xi1>, vector<16x32xf32>
    %410 = vector.broadcast %404 : vector<16x1xf32> to vector<16x512xf32>
    %411 = arith.cmpf oge, %399, %410 : vector<16x512xf32>
    %cst_153 = arith.constant 0xFF800000 : f32
    %412 = vector.broadcast %cst_153 : f32 to vector<16x512xf32>
    %413 = arith.select %411, %412, %399 : vector<16x512xi1>, vector<16x512xf32>
    %cst_154 = arith.constant dense<0xFF800000> : vector<16xf32>
    %414 = vector.multi_reduction <maximumf>, %409, %cst_154 [1] : vector<16x32xf32> to vector<16xf32>
    %415 = vector.shape_cast %414 : vector<16xf32> to vector<16x1xf32>
    %cst_155 = arith.constant dense<0xFF800000> : vector<16xf32>
    %416 = vector.multi_reduction <maximumf>, %413, %cst_155 [1] : vector<16x512xf32> to vector<16xf32>
    %417 = vector.shape_cast %416 : vector<16xf32> to vector<16x1xf32>
    %418 = arith.maximumf %415, %417 : vector<16x1xf32>
    %c0_156 = arith.constant 0 : index
    %c29 = arith.constant 29 : index
    %419 = vector.load %arg6[%c0_156, %c29] : memref<16x32xf32, #tpu.memory_space<vmem>>, vector<16x1xf32>
    tpu.vector_store %arg6[%c0_156, %c29], %418 {strides = array<i32>} : memref<16x32xf32, #tpu.memory_space<vmem>>, vector<16x1xf32>,
    %420 = vector.broadcast %418 : vector<16x1xf32> to vector<16x32xf32>
    %421 = arith.cmpf oge, %409, %420 : vector<16x32xf32>
    %cst_157 = arith.constant 0xFF800000 : f32
    %422 = vector.broadcast %cst_157 : f32 to vector<16x32xf32>
    %423 = arith.select %421, %422, %409 : vector<16x32xi1>, vector<16x32xf32>
    %424 = vector.broadcast %418 : vector<16x1xf32> to vector<16x512xf32>
    %425 = arith.cmpf oge, %413, %424 : vector<16x512xf32>
    %cst_158 = arith.constant 0xFF800000 : f32
    %426 = vector.broadcast %cst_158 : f32 to vector<16x512xf32>
    %427 = arith.select %425, %426, %413 : vector<16x512xi1>, vector<16x512xf32>
    %cst_159 = arith.constant dense<0xFF800000> : vector<16xf32>
    %428 = vector.multi_reduction <maximumf>, %423, %cst_159 [1] : vector<16x32xf32> to vector<16xf32>
    %429 = vector.shape_cast %428 : vector<16xf32> to vector<16x1xf32>
    %cst_160 = arith.constant dense<0xFF800000> : vector<16xf32>
    %430 = vector.multi_reduction <maximumf>, %427, %cst_160 [1] : vector<16x512xf32> to vector<16xf32>
    %431 = vector.shape_cast %430 : vector<16xf32> to vector<16x1xf32>
    %432 = arith.maximumf %429, %431 : vector<16x1xf32>
    %c0_161 = arith.constant 0 : index
    %c30 = arith.constant 30 : index
    %433 = vector.load %arg6[%c0_161, %c30] : memref<16x32xf32, #tpu.memory_space<vmem>>, vector<16x1xf32>
    tpu.vector_store %arg6[%c0_161, %c30], %432 {strides = array<i32>} : memref<16x32xf32, #tpu.memory_space<vmem>>, vector<16x1xf32>,
    %434 = vector.broadcast %432 : vector<16x1xf32> to vector<16x32xf32>
    %435 = arith.cmpf oge, %423, %434 : vector<16x32xf32>
    %cst_162 = arith.constant 0xFF800000 : f32
    %436 = vector.broadcast %cst_162 : f32 to vector<16x32xf32>
    %437 = arith.select %435, %436, %423 : vector<16x32xi1>, vector<16x32xf32>
    %438 = vector.broadcast %432 : vector<16x1xf32> to vector<16x512xf32>
    %439 = arith.cmpf oge, %427, %438 : vector<16x512xf32>
    %cst_163 = arith.constant 0xFF800000 : f32
    %440 = vector.broadcast %cst_163 : f32 to vector<16x512xf32>
    %441 = arith.select %439, %440, %427 : vector<16x512xi1>, vector<16x512xf32>
    %cst_164 = arith.constant dense<0xFF800000> : vector<16xf32>
    %442 = vector.multi_reduction <maximumf>, %437, %cst_164 [1] : vector<16x32xf32> to vector<16xf32>
    %443 = vector.shape_cast %442 : vector<16xf32> to vector<16x1xf32>
    %cst_165 = arith.constant dense<0xFF800000> : vector<16xf32>
    %444 = vector.multi_reduction <maximumf>, %441, %cst_165 [1] : vector<16x512xf32> to vector<16xf32>
    %445 = vector.shape_cast %444 : vector<16xf32> to vector<16x1xf32>
    %446 = arith.maximumf %443, %445 : vector<16x1xf32>
    %c0_166 = arith.constant 0 : index
    %c31 = arith.constant 31 : index
    %447 = vector.load %arg6[%c0_166, %c31] : memref<16x32xf32, #tpu.memory_space<vmem>>, vector<16x1xf32>
    tpu.vector_store %arg6[%c0_166, %c31], %446 {strides = array<i32>} : memref<16x32xf32, #tpu.memory_space<vmem>>, vector<16x1xf32>,
    %c0_i32_167 = arith.constant 0 : i32
    %448 = arith.cmpi eq, %arg1, %c0_i32_167 : i32
    %449 = arith.extui %448 : i1 to i32
    %c0_i32_168 = arith.constant 0 : i32
    %450 = arith.cmpi ne, %449, %c0_i32_168 : i32
    scf.if %450 {
      %c0_169 = arith.constant 0 : index
      %c0_170 = arith.constant 0 : index
      %451 = vector.load %arg6[%c0_169, %c0_170] : memref<16x32xf32, #tpu.memory_space<vmem>>, vector<16x32xf32>
      %cst_171 = arith.constant dense<0x7F800000> : vector<16xf32>
      %452 = vector.multi_reduction <minimumf>, %451, %cst_171 [1] : vector<16x32xf32> to vector<16xf32>
      %453 = vector.shape_cast %452 : vector<16xf32> to vector<16x1xf32>
      %c0_172 = arith.constant 0 : index
      %c0_173 = arith.constant 0 : index
      %454 = vector.load %arg5[%c0_172, %c0_173] : memref<16x1xf32, #tpu.memory_space<vmem>>, vector<16x1xf32>
      tpu.vector_store %arg5[%c0_172, %c0_173], %453 {strides = array<i32>} : memref<16x1xf32, #tpu.memory_space<vmem>>, vector<16x1xf32>,
    } else {
    }
    return
  }
  func.func @transform_0(%arg0: i32, %arg1: i32) -> (i32, i32) {
    %c0_i32 = arith.constant 0 : i32
    %c0_i32_0 = arith.constant 0 : i32
    return %arg0, %c0_i32 : i32, i32
  }
  func.func @transform_1(%arg0: i32, %arg1: i32) -> (i32, i32) {
    %c0_i32 = arith.constant 0 : i32
    %c0_i32_0 = arith.constant 0 : i32
    return %c0_i32, %arg1 : i32, i32
  }
  func.func @transform_2(%arg0: i32, %arg1: i32) -> (i32, i32) {
    %c0_i32 = arith.constant 0 : i32
    return %arg0, %arg1 : i32, i32
  }
  func.func @transform_3(%arg0: i32, %arg1: i32) -> (i32, i32) {
    %c0_i32 = arith.constant 0 : i32
    %c0_i32_0 = arith.constant 0 : i32
    return %arg0, %c0_i32 : i32, i32
  }
}

</mosaic_0001>

<llo_original>
// kernel: tpu_custom_call.1
$region0: #{tpu_custom_call.1}
  #allocation0 [shape = 'u32[]', space=smem, size = 0x4, offset = 0x4, fixed_abs, tag = 'smem constant byte address 0x4 - core index']
  #allocation1 [shape = 'u32[144,128]{1,0:T(1,128)}', space=vmem, size = 0x12000, scoped, tag = 'internal scratch']
  #allocation2 [shape = 'f32[16,32]{1,0:T(8,128)}', space=vmem, size = 0x2000, scoped, tag = 'scratch operand']
  %s0 = inlined_call_operand.hbm [shape: bf16[16,32], index: 0, kind: input, shape index: {}]
  %s1 = inlined_call_operand.hbm [shape: bf16[32,512], index: 1, kind: input, shape index: {}]
  %s2 = inlined_call_operand.hbm [shape: f32[16,512], index: 2, kind: output, shape index: {0}]
  %s3 = inlined_call_operand.vmem [shape: f32[16,1], index: 3, kind: output, shape index: {1}]
  %4 = xla_tuple %s2, %s3
  %s5 = sld [smem:[#allocation0]]
  $region42: #{tpu_custom_call.1} parent=0
    _
  %s7 = ssub.s32 1, %s5
  %s8 = scalar_select 0, %s7, %s5
  $region1: #{tpu_custom_call.1} parent=0
    #allocation3 [shape = 'u8[4096]{0}', space=vmem, size = 0x1000, scoped, tag = 'input window, operand 0, single buffered']
    #allocation4 [shape = 's32[1]{0}', space=sflag, size = 0x4, scoped, tag = 'scoped memory for tpu_custom_call.1']
    #allocation5 [shape = 's32[1]{0}', space=sflag, size = 0x4, scoped, tag = 'scoped memory for tpu_custom_call.1']
    #allocation6 [shape = 'u8[32768]{0}', space=vmem, size = 0x8000, scoped, tag = 'input window, operand 1, single buffered']
    #allocation7 [shape = 's32[1]{0}', space=sflag, size = 0x4, scoped, tag = 'scoped memory for tpu_custom_call.1']
    #allocation8 [shape = 'u8[32768]{0}', space=vmem, size = 0x8000, scoped, tag = 'output window, operand 0, single buffered']
    %9 = vsyncpa [#allocation4], 0
    %10 = vsyncpa [#allocation7], 0
    %11 = vsyncpa [#allocation5], 0
    // Predicated region
    $region2: #{tpu_custom_call.1} parent=1 // pred_check
      _
    $region3: #{tpu_custom_call.1} parent=1 // pred_check_branch
      %13 = sbr.rel (0) target = $region5
    $region4: #{tpu_custom_call.1} parent=1 // pred_region
      %s15 = ssub.s32 128, 128
      %16 = vsyncadd [#allocation4], %s15
      %s17 = sshll.u32 [#allocation3], 4
      %s18 = int_to_ptr.vmem [resolvable:$true] %s17
      %23 = dma.hbm_to_vmem [thread:$0]  %s0, 128, %s18, [#allocation4], 64, 64, 4
    $region5: #{tpu_custom_call.1} parent=1 // pred_fallthru
      _
    // Predicated region
    $region6: #{tpu_custom_call.1} parent=1 // pred_check
      _
    $region7: #{tpu_custom_call.1} parent=1 // pred_check_branch
      %25 = sbr.rel (0) target = $region9
    $region8: #{tpu_custom_call.1} parent=1 // pred_region
      %s27 = ssub.s32 1024, 1024
      %28 = vsyncadd [#allocation7], %s27
      %s29 = sshll.u32 [#allocation6], 4
      %s30 = int_to_ptr.vmem [resolvable:$true] %s29
      %35 = dma.hbm_to_vmem [thread:$0]  %s1, 1024, %s30, [#allocation7], 256, 256, 16
    $region9: #{tpu_custom_call.1} parent=1 // pred_fallthru
      _
    // Predicated region
    $region10: #{tpu_custom_call.1} parent=1 // pred_check
      _
    $region11: #{tpu_custom_call.1} parent=1 // pred_check_branch
      %37 = sbr.rel (0) target = $region13
    $region12: #{tpu_custom_call.1} parent=1 // pred_region
      %38 = dma.done [#allocation4], 128
    $region13: #{tpu_custom_call.1} parent=1 // pred_fallthru
      _
    // Predicated region
    $region14: #{tpu_custom_call.1} parent=1 // pred_check
      _
    $region15: #{tpu_custom_call.1} parent=1 // pred_check_branch
      %40 = sbr.rel (0) target = $region17
    $region16: #{tpu_custom_call.1} parent=1 // pred_region
      %41 = dma.done [#allocation7], 1024
    $region17: #{tpu_custom_call.1} parent=1 // pred_fallthru
      _
    %p43 = scmp.eq.s32.totalorder 0, 0
    // Predicated region
    $region18: #{tpu_custom_call.1} parent=1 // pred_check
      %p44 = pneg %p43
    $region19: #{tpu_custom_call.1} parent=1 // pred_check_branch
      %46 = sbr.rel (%p44) target = $region21
    $region20: #{tpu_custom_call.1} parent=1 // pred_region
      %vm47 = vcmask 261120
      %48 = vst.msk [vmem:[#allocation2] sm:$0xff] %vm47, -inf
      %49 = vst.msk [vmem:[#allocation2 + $0x8] sm:$0xff] %vm47, -inf
    $region21: #{tpu_custom_call.1} parent=1 // pred_fallthru
      _
    %v50 = vld [vmem:[#allocation3] sm:$0xf]
    %v51 = vld [vmem:[#allocation3 + $0x4] sm:$0xf]
    %v52 = vld [vmem:[#allocation6] sm:$0xff]
    %v53 = vld [vmem:[#allocation6 + $0x8] sm:$0xff]
    %v54 = vld [vmem:[#allocation6 + $0x10] sm:$0xff]
    %v55 = vld [vmem:[#allocation6 + $0x18] sm:$0xff]
    %v56 = vld [vmem:[#allocation6 + $0x20] sm:$0xff]
    %v57 = vld [vmem:[#allocation6 + $0x28] sm:$0xff]
    %v58 = vld [vmem:[#allocation6 + $0x30] sm:$0xff]
    %v59 = vld [vmem:[#allocation6 + $0x38] sm:$0xff]
    %v62 = vunpack.c.l.b16 %v50
    %v63 = vunpack.c.l.b16 %v51
    %v64 = vpack.c.b16 %v63, %v62
    %v73 = vunpack.c.l.b16 %v52
    %v74 = vunpack.c.h.b16 %v52
    %v75 = vunpack.c.l.b16 %v53
    %v76 = vunpack.c.h.b16 %v53
    %v77 = vunpack.c.l.b16 %v54
    %v78 = vunpack.c.h.b16 %v54
    %v79 = vunpack.c.l.b16 %v55
    %v80 = vunpack.c.h.b16 %v55
    %v81 = vunpack.c.l.b16 %v56
    %v82 = vunpack.c.h.b16 %v56
    %v83 = vunpack.c.l.b16 %v57
    %v84 = vunpack.c.h.b16 %v57
    %v85 = vunpack.c.l.b16 %v58
    %v86 = vunpack.c.h.b16 %v58
    %v87 = vunpack.c.l.b16 %v59
    %v88 = vunpack.c.h.b16 %v59
    %v89 = vpack.c.b16 %v77, %v73
    %v90 = vpack.c.b16 %v78, %v74
    %v91 = vpack.c.b16 %v79, %v75
    %v92 = vpack.c.b16 %v80, %v76
    %v93 = vpack.c.b16 %v85, %v81
    %v94 = vpack.c.b16 %v86, %v82
    %v95 = vpack.c.b16 %v87, %v83
    %v96 = vpack.c.b16 %v88, %v84
    %vm105 = vcmask 261120
    %v107 = vsel %vm105, %v64, 0
    %109 = vmatprep.subr.bf16.mxu0 %v90
    %110 = vmatpush1.bf16.msra.mxu0 %v89
    %111 = vmatprep.subr.bf16.mxu0 %v94
    %112 = vmatpush1.bf16.msra.mxu0 %v93
    %113 = vmatprep.subr.bf16.mxu0 0
    %114 = vmatpush1.bf16.msra.mxu0 0
    %115 = vmatprep.subr.bf16.mxu0 0
    %116 = vmatpush1.bf16.msra.mxu0 0
    %117 = vmatprep.subr.bf16.mxu0 0
    %118 = vmatpush1.bf16.msra.mxu0 0
    %119 = vmatprep.subr.bf16.mxu0 0
    %120 = vmatpush1.bf16.msra.mxu0 0
    %121 = vmatprep.subr.bf16.mxu0 0
    %122 = vmatpush1.bf16.msra.mxu0 0
    %123 = vmatprep.subr.bf16.mxu0 0
    %124 = vmatpush1.bf16.msra.mxu0 0
    %125 = vmatprep.subr.bf16.mxu0 0
    %126 = vmatpush1.bf16.msra.mxu0 0
    %127 = vmatprep.subr.bf16.mxu0 0
    %128 = vmatpush1.bf16.msra.mxu0 0
    %129 = vmatprep.subr.bf16.mxu0 0
    %130 = vmatpush1.bf16.msra.mxu0 0
    %131 = vmatprep.subr.bf16.mxu0 0
    %132 = vmatpush1.bf16.msra.mxu0 0
    %133 = vmatprep.subr.bf16.mxu0 0
    %134 = vmatpush1.bf16.msra.mxu0 0
    %135 = vmatprep.subr.bf16.mxu0 0
    %136 = vmatpush1.bf16.msra.mxu0 0
    %137 = vmatprep.subr.bf16.mxu0 0
    %138 = vmatpush1.bf16.msra.mxu0 0
    %139 = vmatprep.subr.bf16.mxu0 0
    %140 = vmatpush1.bf16.msra.mxu0 0
    %141 = vmatprep.mubr.bf16.mxu0 0
    %142 = vmatmul.mubr.bf16.gmra.mrb[0].mxu0 %v107
    %v143 = vpop.f32.mrb[0].mxu0
    %v144 = vadd.f32 0.0, %v143
    %v145 = vpop.f32.mrb[0].mxu0
    %v146 = vadd.f32 0.0, %v145
    %v147 = vpop.f32.mrb[0].mxu0
    %v148 = vadd.f32 0.0, %v147
    %v149 = vpop.f32.mrb[0].mxu0
    %v150 = vadd.f32 0.0, %v149
    %151 = vdwg.mxu0
    %152 = vmatprep.subr.bf16.mxu0 %v92
    %153 = vmatpush1.bf16.msra.mxu0 %v91
    %154 = vmatprep.subr.bf16.mxu0 %v96
    %155 = vmatpush1.bf16.msra.mxu0 %v95
    %156 = vmatprep.subr.bf16.mxu0 0
    %157 = vmatpush1.bf16.msra.mxu0 0
    %158 = vmatprep.subr.bf16.mxu0 0
    %159 = vmatpush1.bf16.msra.mxu0 0
    %160 = vmatprep.subr.bf16.mxu0 0
    %161 = vmatpush1.bf16.msra.mxu0 0
    %162 = vmatprep.subr.bf16.mxu0 0
    %163 = vmatpush1.bf16.msra.mxu0 0
    %164 = vmatprep.subr.bf16.mxu0 0
    %165 = vmatpush1.bf16.msra.mxu0 0
    %166 = vmatprep.subr.bf16.mxu0 0
    %167 = vmatpush1.bf16.msra.mxu0 0
    %168 = vmatprep.subr.bf16.mxu0 0
    %169 = vmatpush1.bf16.msra.mxu0 0
    %170 = vmatprep.subr.bf16.mxu0 0
    %171 = vmatpush1.bf16.msra.mxu0 0
    %172 = vmatprep.subr.bf16.mxu0 0
    %173 = vmatpush1.bf16.msra.mxu0 0
    %174 = vmatprep.subr.bf16.mxu0 0
    %175 = vmatpush1.bf16.msra.mxu0 0
    %176 = vmatprep.subr.bf16.mxu0 0
    %177 = vmatpush1.bf16.msra.mxu0 0
    %178 = vmatprep.subr.bf16.mxu0 0
    %179 = vmatpush1.bf16.msra.mxu0 0
    %180 = vmatprep.subr.bf16.mxu0 0
    %181 = vmatpush1.bf16.msra.mxu0 0
    %182 = vmatprep.subr.bf16.mxu0 0
    %183 = vmatpush1.bf16.msra.mxu0 0
    %184 = vmatprep.mubr.bf16.mxu0 0
    %185 = vmatmul.mubr.bf16.gmra.mrb[0].mxu0 %v107
    %v186 = vpop.f32.mrb[0].mxu0
    %v187 = vadd.f32 0.0, %v186
    %v188 = vpop.f32.mrb[0].mxu0
    %v189 = vadd.f32 0.0, %v188
    %v190 = vpop.f32.mrb[0].mxu0
    %v191 = vadd.f32 0.0, %v190
    %v192 = vpop.f32.mrb[0].mxu0
    %v193 = vadd.f32 0.0, %v192
    %194 = vdwg.mxu0
    %195 = vst [vmem:[#allocation8] sm:$0xff] %v144
    %196 = vst [vmem:[#allocation8 + $0x8] sm:$0xff] %v146
    %197 = vst [vmem:[#allocation8 + $0x10] sm:$0xff] %v187
    %198 = vst [vmem:[#allocation8 + $0x18] sm:$0xff] %v189
    %199 = vst [vmem:[#allocation8 + $0x20] sm:$0xff] %v148
    %200 = vst [vmem:[#allocation8 + $0x28] sm:$0xff] %v150
    %201 = vst [vmem:[#allocation8 + $0x30] sm:$0xff] %v191
    %202 = vst [vmem:[#allocation8 + $0x38] sm:$0xff] %v193
    %v203 = vld [vmem:[#allocation2] sm:$0xff]
    %v204 = vld [vmem:[#allocation2 + $0x8] sm:$0xff]
    %v205 = vsel %vm105, %v203, -inf
    %206 = vmax.xlane.f32.xlu0 %v205
    %v207 = vpop.xlane.xlu0 %206
    %v208 = vsel %vm105, %v204, -inf
    %209 = vmax.xlane.f32.xlu0 %v208
    %v210 = vpop.xlane.xlu0 %209
    %v211 = vmax.f32 %v144, %v187
    %v212 = vmax.f32 %v146, %v189
    %v213 = vmax.f32 %v211, %v212
    %214 = vmax.xlane.f32.xlu0 %v213
    %v215 = vpop.xlane.xlu0 %214
    %v216 = vmax.f32 %v148, %v191
    %v217 = vmax.f32 %v150, %v193
    %v218 = vmax.f32 %v216, %v217
    %219 = vmax.xlane.f32.xlu0 %v218
    %v220 = vpop.xlane.xlu0 %219
    %v221 = vmax.f32 %v207, %v215
    %v222 = vmax.f32 %v210, %v220
    %vm223 = vcmask 7168
    %224 = vst.msk [vmem:[#allocation2] sm:$0xff] %vm223, %v221
    %225 = vst.msk [vmem:[#allocation2 + $0x8] sm:$0xff] %vm223, %v222
    %vm226 = vcmp.ge.f32.partialorder %v203, %v221
    %vm227 = vcmp.ge.f32.partialorder %v204, %v222
    %v228 = vsel %vm226, -inf, %v203
    %v229 = vsel %vm227, -inf, %v204
    %vm230 = vcmp.ge.f32.partialorder %v144, %v221
    %vm231 = vcmp.ge.f32.partialorder %v146, %v221
    %vm232 = vcmp.ge.f32.partialorder %v187, %v221
    %vm233 = vcmp.ge.f32.partialorder %v189, %v221
    %vm234 = vcmp.ge.f32.partialorder %v148, %v222
    %vm235 = vcmp.ge.f32.partialorder %v150, %v222
    %vm236 = vcmp.ge.f32.partialorder %v191, %v222
    %vm237 = vcmp.ge.f32.partialorder %v193, %v222
    %v238 = vsel %vm230, -inf, %v144
    %v239 = vsel %vm231, -inf, %v146
    %v240 = vsel %vm232, -inf, %v187
    %v241 = vsel %vm233, -inf, %v189
    %v242 = vsel %vm234, -inf, %v148
    %v243 = vsel %vm235, -inf, %v150
    %v244 = vsel %vm236, -inf, %v191
    %v245 = vsel %vm237, -inf, %v193
    %v246 = vsel %vm105, %v228, -inf
    %247 = vmax.xlane.f32.xlu0 %v246
    %v248 = vpop.xlane.xlu0 %247
    %v249 = vsel %vm105, %v229, -inf
    %250 = vmax.xlane.f32.xlu0 %v249
    %v251 = vpop.xlane.xlu0 %250
    %v252 = vmax.f32 %v238, %v240
    %v253 = vmax.f32 %v239, %v241
    %v254 = vmax.f32 %v252, %v253
    %255 = vmax.xlane.f32.xlu0 %v254
    %v256 = vpop.xlane.xlu0 %255
    %v257 = vmax.f32 %v242, %v244
    %v258 = vmax.f32 %v243, %v245
    %v259 = vmax.f32 %v257, %v258
    %260 = vmax.xlane.f32.xlu0 %v259
    %v261 = vpop.xlane.xlu0 %260
    %v262 = vmax.f32 %v248, %v256
    %v263 = vmax.f32 %v251, %v261
    %vm264 = vcmask 15368
    %265 = vst.msk [vmem:[#allocation2] sm:$0xff] %vm264, %v262
    %266 = vst.msk [vmem:[#allocation2 + $0x8] sm:$0xff] %vm264, %v263
    %vm267 = vcmp.ge.f32.partialorder %v228, %v262
    %vm268 = vcmp.ge.f32.partialorder %v229, %v263
    %v269 = vsel %vm267, -inf, %v228
    %v270 = vsel %vm268, -inf, %v229
    %vm271 = vcmp.ge.f32.partialorder %v238, %v262
    %vm272 = vcmp.ge.f32.partialorder %v239, %v262
    %vm273 = vcmp.ge.f32.partialorder %v240, %v262
    %vm274 = vcmp.ge.f32.partialorder %v241, %v262
    %vm275 = vcmp.ge.f32.partialorder %v242, %v263
    %vm276 = vcmp.ge.f32.partialorder %v243, %v263
    %vm277 = vcmp.ge.f32.partialorder %v244, %v263
    %vm278 = vcmp.ge.f32.partialorder %v245, %v263
    %v279 = vsel %vm271, -inf, %v238
    %v280 = vsel %vm272, -inf, %v239
    %v281 = vsel %vm273, -inf, %v240
    %v282 = vsel %vm274, -inf, %v241
    %v283 = vsel %vm275, -inf, %v242
    %v284 = vsel %vm276, -inf, %v243
    %v285 = vsel %vm277, -inf, %v244
    %v286 = vsel %vm278, -inf, %v245
    %v287 = vsel %vm105, %v269, -inf
    %288 = vmax.xlane.f32.xlu0 %v287
    %v289 = vpop.xlane.xlu0 %288
    %v290 = vsel %vm105, %v270, -inf
    %291 = vmax.xlane.f32.xlu0 %v290
    %v292 = vpop.xlane.xlu0 %291
    %v293 = vmax.f32 %v279, %v281
    %v294 = vmax.f32 %v280, %v282
    %v295 = vmax.f32 %v293, %v294
    %296 = vmax.xlane.f32.xlu0 %v295
    %v297 = vpop.xlane.xlu0 %296
    %v298 = vmax.f32 %v283, %v285
    %v299 = vmax.f32 %v284, %v286
    %v300 = vmax.f32 %v298, %v299
    %301 = vmax.xlane.f32.xlu0 %v300
    %v302 = vpop.xlane.xlu0 %301
    %v303 = vmax.f32 %v289, %v297
    %v304 = vmax.f32 %v292, %v302
    %vm305 = vcmask 23568
    %306 = vst.msk [vmem:[#allocation2] sm:$0xff] %vm305, %v303
    %307 = vst.msk [vmem:[#allocation2 + $0x8] sm:$0xff] %vm305, %v304
    %vm308 = vcmp.ge.f32.partialorder %v269, %v303
    %vm309 = vcmp.ge.f32.partialorder %v270, %v304
    %v310 = vsel %vm308, -inf, %v269
    %v311 = vsel %vm309, -inf, %v270
    %vm312 = vcmp.ge.f32.partialorder %v279, %v303
    %vm313 = vcmp.ge.f32.partialorder %v280, %v303
    %vm314 = vcmp.ge.f32.partialorder %v281, %v303
    %vm315 = vcmp.ge.f32.partialorder %v282, %v303
    %vm316 = vcmp.ge.f32.partialorder %v283, %v304
    %vm317 = vcmp.ge.f32.partialorder %v284, %v304
    %vm318 = vcmp.ge.f32.partialorder %v285, %v304
    %vm319 = vcmp.ge.f32.partialorder %v286, %v304
    %v320 = vsel %vm312, -inf, %v279
    %v321 = vsel %vm313, -inf, %v280
    %v322 = vsel %vm314, -inf, %v281
    %v323 = vsel %vm315, -inf, %v282
    %v324 = vsel %vm316, -inf, %v283
    %v325 = vsel %vm317, -inf, %v284
    %v326 = vsel %vm318, -inf, %v285
    %v327 = vsel %vm319, -inf, %v286
    %v328 = vsel %vm105, %v310, -inf
    %329 = vmax.xlane.f32.xlu0 %v328
    %v330 = vpop.xlane.xlu0 %329
    %v331 = vsel %vm105, %v311, -inf
    %332 = vmax.xlane.f32.xlu0 %v331
    %v333 = vpop.xlane.xlu0 %332
    %v334 = vmax.f32 %v320, %v322
    %v335 = vmax.f32 %v321, %v323
    %v336 = vmax.f32 %v334, %v335
    %337 = vmax.xlane.f32.xlu0 %v336
    %v338 = vpop.xlane.xlu0 %337
    %v339 = vmax.f32 %v324, %v326
    %v340 = vmax.f32 %v325, %v327
    %v341 = vmax.f32 %v339, %v340
    %342 = vmax.xlane.f32.xlu0 %v341
    %v343 = vpop.xlane.xlu0 %342
    %v344 = vmax.f32 %v330, %v338
    %v345 = vmax.f32 %v333, %v343
    %vm346 = vcmask 31768
    %347 = vst.msk [vmem:[#allocation2] sm:$0xff] %vm346, %v344
    %348 = vst.msk [vmem:[#allocation2 + $0x8] sm:$0xff] %vm346, %v345
    %vm349 = vcmp.ge.f32.partialorder %v310, %v344
    %vm350 = vcmp.ge.f32.partialorder %v311, %v345
    %v351 = vsel %vm349, -inf, %v310
    %v352 = vsel %vm350, -inf, %v311
    %vm353 = vcmp.ge.f32.partialorder %v320, %v344
    %vm354 = vcmp.ge.f32.partialorder %v321, %v344
    %vm355 = vcmp.ge.f32.partialorder %v322, %v344
    %vm356 = vcmp.ge.f32.partialorder %v323, %v344
    %vm357 = vcmp.ge.f32.partialorder %v324, %v345
    %vm358 = vcmp.ge.f32.partialorder %v325, %v345
    %vm359 = vcmp.ge.f32.partialorder %v326, %v345
    %vm360 = vcmp.ge.f32.partialorder %v327, %v345
    %v361 = vsel %vm353, -inf, %v320
    %v362 = vsel %vm354, -inf, %v321
    %v363 = vsel %vm355, -inf, %v322
    %v364 = vsel %vm356, -inf, %v323
    %v365 = vsel %vm357, -inf, %v324
    %v366 = vsel %vm358, -inf, %v325
    %v367 = vsel %vm359, -inf, %v326
    %v368 = vsel %vm360, -inf, %v327
    %v369 = vsel %vm105, %v351, -inf
    %370 = vmax.xlane.f32.xlu0 %v369
    %v371 = vpop.xlane.xlu0 %370
    %v372 = vsel %vm105, %v352, -inf
    %373 = vmax.xlane.f32.xlu0 %v372
    %v374 = vpop.xlane.xlu0 %373
    %v375 = vmax.f32 %v361, %v363
    %v376 = vmax.f32 %v362, %v364
    %v377 = vmax.f32 %v375, %v376
    %378 = vmax.xlane.f32.xlu0 %v377
    %v379 = vpop.xlane.xlu0 %378
    %v380 = vmax.f32 %v365, %v367
    %v381 = vmax.f32 %v366, %v368
    %v382 = vmax.f32 %v380, %v381
    %383 = vmax.xlane.f32.xlu0 %v382
    %v384 = vpop.xlane.xlu0 %383
    %v385 = vmax.f32 %v371, %v379
    %v386 = vmax.f32 %v374, %v384
    %vm387 = vcmask 39968
    %388 = vst.msk [vmem:[#allocation2] sm:$0xff] %vm387, %v385
    %389 = vst.msk [vmem:[#allocation2 + $0x8] sm:$0xff] %vm387, %v386
    %vm390 = vcmp.ge.f32.partialorder %v351, %v385
    %vm391 = vcmp.ge.f32.partialorder %v352, %v386
    %v392 = vsel %vm390, -inf, %v351
    %v393 = vsel %vm391, -inf, %v352
    %vm394 = vcmp.ge.f32.partialorder %v361, %v385
    %vm395 = vcmp.ge.f32.partialorder %v362, %v385
    %vm396 = vcmp.ge.f32.partialorder %v363, %v385
    %vm397 = vcmp.ge.f32.partialorder %v364, %v385
    %vm398 = vcmp.ge.f32.partialorder %v365, %v386
    %vm399 = vcmp.ge.f32.partialorder %v366, %v386
    %vm400 = vcmp.ge.f32.partialorder %v367, %v386
    %vm401 = vcmp.ge.f32.partialorder %v368, %v386
    %v402 = vsel %vm394, -inf, %v361
    %v403 = vsel %vm395, -inf, %v362
    %v404 = vsel %vm396, -inf, %v363
    %v405 = vsel %vm397, -inf, %v364
    %v406 = vsel %vm398, -inf, %v365
    %v407 = vsel %vm399, -inf, %v366
    %v408 = vsel %vm400, -inf, %v367
    %v409 = vsel %vm401, -inf, %v368
    %v410 = vsel %vm105, %v392, -inf
    %411 = vmax.xlane.f32.xlu0 %v410
    %v412 = vpop.xlane.xlu0 %411
    %v413 = vsel %vm105, %v393, -inf
    %414 = vmax.xlane.f32.xlu0 %v413
    %v415 = vpop.xlane.xlu0 %414
    %v416 = vmax.f32 %v402, %v404
    %v417 = vmax.f32 %v403, %v405
    %v418 = vmax.f32 %v416, %v417
    %419 = vmax.xlane.f32.xlu0 %v418
    %v420 = vpop.xlane.xlu0 %419
    %v421 = vmax.f32 %v406, %v408
    %v422 = vmax.f32 %v407, %v409
    %v423 = vmax.f32 %v421, %v422
    %424 = vmax.xlane.f32.xlu0 %v423
    %v425 = vpop.xlane.xlu0 %424
    %v426 = vmax.f32 %v412, %v420
    %v427 = vmax.f32 %v415, %v425
    %vm428 = vcmask 48168
    %429 = vst.msk [vmem:[#allocation2] sm:$0xff] %vm428, %v426
    %430 = vst.msk [vmem:[#allocation2 + $0x8] sm:$0xff] %vm428, %v427
    %vm431 = vcmp.ge.f32.partialorder %v392, %v426
    %vm432 = vcmp.ge.f32.partialorder %v393, %v427
    %v433 = vsel %vm431, -inf, %v392
    %v434 = vsel %vm432, -inf, %v393
    %vm435 = vcmp.ge.f32.partialorder %v402, %v426
    %vm436 = vcmp.ge.f32.partialorder %v403, %v426
    %vm437 = vcmp.ge.f32.partialorder %v404, %v426
    %vm438 = vcmp.ge.f32.partialorder %v405, %v426
    %vm439 = vcmp.ge.f32.partialorder %v406, %v427
    %vm440 = vcmp.ge.f32.partialorder %v407, %v427
    %vm441 = vcmp.ge.f32.partialorder %v408, %v427
    %vm442 = vcmp.ge.f32.partialorder %v409, %v427
    %v443 = vsel %vm435, -inf, %v402
    %v444 = vsel %vm436, -inf, %v403
    %v445 = vsel %vm437, -inf, %v404
    %v446 = vsel %vm438, -inf, %v405
    %v447 = vsel %vm439, -inf, %v406
    %v448 = vsel %vm440, -inf, %v407
    %v449 = vsel %vm441, -inf, %v408
    %v450 = vsel %vm442, -inf, %v409
    %v451 = vsel %vm105, %v433, -inf
    %452 = vmax.xlane.f32.xlu0 %v451
    %v453 = vpop.xlane.xlu0 %452
    %v454 = vsel %vm105, %v434, -inf
    %455 = vmax.xlane.f32.xlu0 %v454
    %v456 = vpop.xlane.xlu0 %455
    %v457 = vmax.f32 %v443, %v445
    %v458 = vmax.f32 %v444, %v446
    %v459 = vmax.f32 %v457, %v458
    %460 = vmax.xlane.f32.xlu0 %v459
    %v461 = vpop.xlane.xlu0 %460
    %v462 = vmax.f32 %v447, %v449
    %v463 = vmax.f32 %v448, %v450
    %v464 = vmax.f32 %v462, %v463
    %465 = vmax.xlane.f32.xlu0 %v464
    %v466 = vpop.xlane.xlu0 %465
    %v467 = vmax.f32 %v453, %v461
    %v468 = vmax.f32 %v456, %v466
    %vm469 = vcmask 56368
    %470 = vst.msk [vmem:[#allocation2] sm:$0xff] %vm469, %v467
    %471 = vst.msk [vmem:[#allocation2 + $0x8] sm:$0xff] %vm469, %v468
    %vm472 = vcmp.ge.f32.partialorder %v433, %v467
    %vm473 = vcmp.ge.f32.partialorder %v434, %v468
    %v474 = vsel %vm472, -inf, %v433
    %v475 = vsel %vm473, -inf, %v434
    %vm476 = vcmp.ge.f32.partialorder %v443, %v467
    %vm477 = vcmp.ge.f32.partialorder %v444, %v467
    %vm478 = vcmp.ge.f32.partialorder %v445, %v467
    %vm479 = vcmp.ge.f32.partialorder %v446, %v467
    %vm480 = vcmp.ge.f32.partialorder %v447, %v468
    %vm481 = vcmp.ge.f32.partialorder %v448, %v468
    %vm482 = vcmp.ge.f32.partialorder %v449, %v468
    %vm483 = vcmp.ge.f32.partialorder %v450, %v468
    %v484 = vsel %vm476, -inf, %v443
    %v485 = vsel %vm477, -inf, %v444
    %v486 = vsel %vm478, -inf, %v445
    %v487 = vsel %vm479, -inf, %v446
    %v488 = vsel %vm480, -inf, %v447
    %v489 = vsel %vm481, -inf, %v448
    %v490 = vsel %vm482, -inf, %v449
    %v491 = vsel %vm483, -inf, %v450
    %v492 = vsel %vm105, %v474, -inf
    %493 = vmax.xlane.f32.xlu0 %v492
    %v494 = vpop.xlane.xlu0 %493
    %v495 = vsel %vm105, %v475, -inf
    %496 = vmax.xlane.f32.xlu0 %v495
    %v497 = vpop.xlane.xlu0 %496
    %v498 = vmax.f32 %v484, %v486
    %v499 = vmax.f32 %v485, %v487
    %v500 = vmax.f32 %v498, %v499
    %501 = vmax.xlane.f32.xlu0 %v500
    %v502 = vpop.xlane.xlu0 %501
    %v503 = vmax.f32 %v488, %v490
    %v504 = vmax.f32 %v489, %v491
    %v505 = vmax.f32 %v503, %v504
    %506 = vmax.xlane.f32.xlu0 %v505
    %v507 = vpop.xlane.xlu0 %506
    %v508 = vmax.f32 %v494, %v502
    %v509 = vmax.f32 %v497, %v507
    %vm510 = vcmask 64568
    %511 = vst.msk [vmem:[#allocation2] sm:$0xff] %vm510, %v508
    %512 = vst.msk [vmem:[#allocation2 + $0x8] sm:$0xff] %vm510, %v509
    %vm513 = vcmp.ge.f32.partialorder %v474, %v508
    %vm514 = vcmp.ge.f32.partialorder %v475, %v509
    %v515 = vsel %vm513, -inf, %v474
    %v516 = vsel %vm514, -inf, %v475
    %vm517 = vcmp.ge.f32.partialorder %v484, %v508
    %vm518 = vcmp.ge.f32.partialorder %v485, %v508
    %vm519 = vcmp.ge.f32.partialorder %v486, %v508
    %vm520 = vcmp.ge.f32.partialorder %v487, %v508
    %vm521 = vcmp.ge.f32.partialorder %v488, %v509
    %vm522 = vcmp.ge.f32.partialorder %v489, %v509
    %vm523 = vcmp.ge.f32.partialorder %v490, %v509
    %vm524 = vcmp.ge.f32.partialorder %v491, %v509
    %v525 = vsel %vm517, -inf, %v484
    %v526 = vsel %vm518, -inf, %v485
    %v527 = vsel %vm519, -inf, %v486
    %v528 = vsel %vm520, -inf, %v487
    %v529 = vsel %vm521, -inf, %v488
    %v530 = vsel %vm522, -inf, %v489
    %v531 = vsel %vm523, -inf, %v490
    %v532 = vsel %vm524, -inf, %v491
    %v533 = vsel %vm105, %v515, -inf
    %534 = vmax.xlane.f32.xlu0 %v533
    %v535 = vpop.xlane.xlu0 %534
    %v536 = vsel %vm105, %v516, -inf
    %537 = vmax.xlane.f32.xlu0 %v536
    %v538 = vpop.xlane.xlu0 %537
    %v539 = vmax.f32 %v525, %v527
    %v540 = vmax.f32 %v526, %v528
    %v541 = vmax.f32 %v539, %v540
    %542 = vmax.xlane.f32.xlu0 %v541
    %v543 = vpop.xlane.xlu0 %542
    %v544 = vmax.f32 %v529, %v531
    %v545 = vmax.f32 %v530, %v532
    %v546 = vmax.f32 %v544, %v545
    %547 = vmax.xlane.f32.xlu0 %v546
    %v548 = vpop.xlane.xlu0 %547
    %v549 = vmax.f32 %v535, %v543
    %v550 = vmax.f32 %v538, %v548
    %vm551 = vcmask 72768
    %552 = vst.msk [vmem:[#allocation2] sm:$0xff] %vm551, %v549
    %553 = vst.msk [vmem:[#allocation2 + $0x8] sm:$0xff] %vm551, %v550
    %vm554 = vcmp.ge.f32.partialorder %v515, %v549
    %vm555 = vcmp.ge.f32.partialorder %v516, %v550
    %v556 = vsel %vm554, -inf, %v515
    %v557 = vsel %vm555, -inf, %v516
    %vm558 = vcmp.ge.f32.partialorder %v525, %v549
    %vm559 = vcmp.ge.f32.partialorder %v526, %v549
    %vm560 = vcmp.ge.f32.partialorder %v527, %v549
    %vm561 = vcmp.ge.f32.partialorder %v528, %v549
    %vm562 = vcmp.ge.f32.partialorder %v529, %v550
    %vm563 = vcmp.ge.f32.partialorder %v530, %v550
    %vm564 = vcmp.ge.f32.partialorder %v531, %v550
    %vm565 = vcmp.ge.f32.partialorder %v532, %v550
    %v566 = vsel %vm558, -inf, %v525
    %v567 = vsel %vm559, -inf, %v526
    %v568 = vsel %vm560, -inf, %v527
    %v569 = vsel %vm561, -inf, %v528
    %v570 = vsel %vm562, -inf, %v529
    %v571 = vsel %vm563, -inf, %v530
    %v572 = vsel %vm564, -inf, %v531
    %v573 = vsel %vm565, -inf, %v532
    %v574 = vsel %vm105, %v556, -inf
    %575 = vmax.xlane.f32.xlu0 %v574
    %v576 = vpop.xlane.xlu0 %575
    %v577 = vsel %vm105, %v557, -inf
    %578 = vmax.xlane.f32.xlu0 %v577
    %v579 = vpop.xlane.xlu0 %578
    %v580 = vmax.f32 %v566, %v568
    %v581 = vmax.f32 %v567, %v569
    %v582 = vmax.f32 %v580, %v581
    %583 = vmax.xlane.f32.xlu0 %v582
    %v584 = vpop.xlane.xlu0 %583
    %v585 = vmax.f32 %v570, %v572
    %v586 = vmax.f32 %v571, %v573
    %v587 = vmax.f32 %v585, %v586
    %588 = vmax.xlane.f32.xlu0 %v587
    %v589 = vpop.xlane.xlu0 %588
    %v590 = vmax.f32 %v576, %v584
    %v591 = vmax.f32 %v579, %v589
    %vm592 = vcmask 80968
    %593 = vst.msk [vmem:[#allocation2] sm:$0xff] %vm592, %v590
    %594 = vst.msk [vmem:[#allocation2 + $0x8] sm:$0xff] %vm592, %v591
    %vm595 = vcmp.ge.f32.partialorder %v556, %v590
    %vm596 = vcmp.ge.f32.partialorder %v557, %v591
    %v597 = vsel %vm595, -inf, %v556
    %v598 = vsel %vm596, -inf, %v557
    %vm599 = vcmp.ge.f32.partialorder %v566, %v590
    %vm600 = vcmp.ge.f32.partialorder %v567, %v590
    %vm601 = vcmp.ge.f32.partialorder %v568, %v590
    %vm602 = vcmp.ge.f32.partialorder %v569, %v590
    %vm603 = vcmp.ge.f32.partialorder %v570, %v591
    %vm604 = vcmp.ge.f32.partialorder %v571, %v591
    %vm605 = vcmp.ge.f32.partialorder %v572, %v591
    %vm606 = vcmp.ge.f32.partialorder %v573, %v591
    %v607 = vsel %vm599, -inf, %v566
    %v608 = vsel %vm600, -inf, %v567
    %v609 = vsel %vm601, -inf, %v568
    %v610 = vsel %vm602, -inf, %v569
    %v611 = vsel %vm603, -inf, %v570
    %v612 = vsel %vm604, -inf, %v571
    %v613 = vsel %vm605, -inf, %v572
    %v614 = vsel %vm606, -inf, %v573
    %v615 = vsel %vm105, %v597, -inf
    %616 = vmax.xlane.f32.xlu0 %v615
    %v617 = vpop.xlane.xlu0 %616
    %v618 = vsel %vm105, %v598, -inf
    %619 = vmax.xlane.f32.xlu0 %v618
    %v620 = vpop.xlane.xlu0 %619
    %v621 = vmax.f32 %v607, %v609
    %v622 = vmax.f32 %v608, %v610
    %v623 = vmax.f32 %v621, %v622
    %624 = vmax.xlane.f32.xlu0 %v623
    %v625 = vpop.xlane.xlu0 %624
    %v626 = vmax.f32 %v611, %v613
    %v627 = vmax.f32 %v612, %v614
    %v628 = vmax.f32 %v626, %v627
    %629 = vmax.xlane.f32.xlu0 %v628
    %v630 = vpop.xlane.xlu0 %629
    %v631 = vmax.f32 %v617, %v625
    %v632 = vmax.f32 %v620, %v630
    %vm633 = vcmask 89168
    %634 = vst.msk [vmem:[#allocation2] sm:$0xff] %vm633, %v631
    %635 = vst.msk [vmem:[#allocation2 + $0x8] sm:$0xff] %vm633, %v632
    %vm636 = vcmp.ge.f32.partialorder %v597, %v631
    %vm637 = vcmp.ge.f32.partialorder %v598, %v632
    %v638 = vsel %vm636, -inf, %v597
    %v639 = vsel %vm637, -inf, %v598
    %vm640 = vcmp.ge.f32.partialorder %v607, %v631
    %vm641 = vcmp.ge.f32.partialorder %v608, %v631
    %vm642 = vcmp.ge.f32.partialorder %v609, %v631
    %vm643 = vcmp.ge.f32.partialorder %v610, %v631
    %vm644 = vcmp.ge.f32.partialorder %v611, %v632
    %vm645 = vcmp.ge.f32.partialorder %v612, %v632
    %vm646 = vcmp.ge.f32.partialorder %v613, %v632
    %vm647 = vcmp.ge.f32.partialorder %v614, %v632
    %v648 = vsel %vm640, -inf, %v607
    %v649 = vsel %vm641, -inf, %v608
    %v650 = vsel %vm642, -inf, %v609
    %v651 = vsel %vm643, -inf, %v610
    %v652 = vsel %vm644, -inf, %v611
    %v653 = vsel %vm645, -inf, %v612
    %v654 = vsel %vm646, -inf, %v613
    %v655 = vsel %vm647, -inf, %v614
    %v656 = vsel %vm105, %v638, -inf
    %657 = vmax.xlane.f32.xlu0 %v656
    %v658 = vpop.xlane.xlu0 %657
    %v659 = vsel %vm105, %v639, -inf
    %660 = vmax.xlane.f32.xlu0 %v659
    %v661 = vpop.xlane.xlu0 %660
    %v662 = vmax.f32 %v648, %v650
    %v663 = vmax.f32 %v649, %v651
    %v664 = vmax.f32 %v662, %v663
    %665 = vmax.xlane.f32.xlu0 %v664
    %v666 = vpop.xlane.xlu0 %665
    %v667 = vmax.f32 %v652, %v654
    %v668 = vmax.f32 %v653, %v655
    %v669 = vmax.f32 %v667, %v668
    %670 = vmax.xlane.f32.xlu0 %v669
    %v671 = vpop.xlane.xlu0 %670
    %v672 = vmax.f32 %v658, %v666
    %v673 = vmax.f32 %v661, %v671
    %vm674 = vcmask 97368
    %675 = vst.msk [vmem:[#allocation2] sm:$0xff] %vm674, %v672
    %676 = vst.msk [vmem:[#allocation2 + $0x8] sm:$0xff] %vm674, %v673
    %vm677 = vcmp.ge.f32.partialorder %v638, %v672
    %vm678 = vcmp.ge.f32.partialorder %v639, %v673
    %v679 = vsel %vm677, -inf, %v638
    %v680 = vsel %vm678, -inf, %v639
    %vm681 = vcmp.ge.f32.partialorder %v648, %v672
    %vm682 = vcmp.ge.f32.partialorder %v649, %v672
    %vm683 = vcmp.ge.f32.partialorder %v650, %v672
    %vm684 = vcmp.ge.f32.partialorder %v651, %v672
    %vm685 = vcmp.ge.f32.partialorder %v652, %v673
    %vm686 = vcmp.ge.f32.partialorder %v653, %v673
    %vm687 = vcmp.ge.f32.partialorder %v654, %v673
    %vm688 = vcmp.ge.f32.partialorder %v655, %v673
    %v689 = vsel %vm681, -inf, %v648
    %v690 = vsel %vm682, -inf, %v649
    %v691 = vsel %vm683, -inf, %v650
    %v692 = vsel %vm684, -inf, %v651
    %v693 = vsel %vm685, -inf, %v652
    %v694 = vsel %vm686, -inf, %v653
    %v695 = vsel %vm687, -inf, %v654
    %v696 = vsel %vm688, -inf, %v655
    %v697 = vsel %vm105, %v679, -inf
    %698 = vmax.xlane.f32.xlu0 %v697
    %v699 = vpop.xlane.xlu0 %698
    %v700 = vsel %vm105, %v680, -inf
    %701 = vmax.xlane.f32.xlu0 %v700
    %v702 = vpop.xlane.xlu0 %701
    %v703 = vmax.f32 %v689, %v691
    %v704 = vmax.f32 %v690, %v692
    %v705 = vmax.f32 %v703, %v704
    %706 = vmax.xlane.f32.xlu0 %v705
    %v707 = vpop.xlane.xlu0 %706
    %v708 = vmax.f32 %v693, %v695
    %v709 = vmax.f32 %v694, %v696
    %v710 = vmax.f32 %v708, %v709
    %711 = vmax.xlane.f32.xlu0 %v710
    %v712 = vpop.xlane.xlu0 %711
    %v713 = vmax.f32 %v699, %v707
    %v714 = vmax.f32 %v702, %v712
    %vm715 = vcmask 105568
    %716 = vst.msk [vmem:[#allocation2] sm:$0xff] %vm715, %v713
    %717 = vst.msk [vmem:[#allocation2 + $0x8] sm:$0xff] %vm715, %v714
    %vm718 = vcmp.ge.f32.partialorder %v679, %v713
    %vm719 = vcmp.ge.f32.partialorder %v680, %v714
    %v720 = vsel %vm718, -inf, %v679
    %v721 = vsel %vm719, -inf, %v680
    %vm722 = vcmp.ge.f32.partialorder %v689, %v713
    %vm723 = vcmp.ge.f32.partialorder %v690, %v713
    %vm724 = vcmp.ge.f32.partialorder %v691, %v713
    %vm725 = vcmp.ge.f32.partialorder %v692, %v713
    %vm726 = vcmp.ge.f32.partialorder %v693, %v714
    %vm727 = vcmp.ge.f32.partialorder %v694, %v714
    %vm728 = vcmp.ge.f32.partialorder %v695, %v714
    %vm729 = vcmp.ge.f32.partialorder %v696, %v714
    %v730 = vsel %vm722, -inf, %v689
    %v731 = vsel %vm723, -inf, %v690
    %v732 = vsel %vm724, -inf, %v691
    %v733 = vsel %vm725, -inf, %v692
    %v734 = vsel %vm726, -inf, %v693
    %v735 = vsel %vm727, -inf, %v694
    %v736 = vsel %vm728, -inf, %v695
    %v737 = vsel %vm729, -inf, %v696
    %v738 = vsel %vm105, %v720, -inf
    %739 = vmax.xlane.f32.xlu0 %v738
    %v740 = vpop.xlane.xlu0 %739
    %v741 = vsel %vm105, %v721, -inf
    %742 = vmax.xlane.f32.xlu0 %v741
    %v743 = vpop.xlane.xlu0 %742
    %v744 = vmax.f32 %v730, %v732
    %v745 = vmax.f32 %v731, %v733
    %v746 = vmax.f32 %v744, %v745
    %747 = vmax.xlane.f32.xlu0 %v746
    %v748 = vpop.xlane.xlu0 %747
    %v749 = vmax.f32 %v734, %v736
    %v750 = vmax.f32 %v735, %v737
    %v751 = vmax.f32 %v749, %v750
    %752 = vmax.xlane.f32.xlu0 %v751
    %v753 = vpop.xlane.xlu0 %752
    %v754 = vmax.f32 %v740, %v748
    %v755 = vmax.f32 %v743, %v753
    %vm756 = vcmask 113768
    %757 = vst.msk [vmem:[#allocation2] sm:$0xff] %vm756, %v754
    %758 = vst.msk [vmem:[#allocation2 + $0x8] sm:$0xff] %vm756, %v755
    %vm759 = vcmp.ge.f32.partialorder %v720, %v754
    %vm760 = vcmp.ge.f32.partialorder %v721, %v755
    %v761 = vsel %vm759, -inf, %v720
    %v762 = vsel %vm760, -inf, %v721
    %vm763 = vcmp.ge.f32.partialorder %v730, %v754
    %vm764 = vcmp.ge.f32.partialorder %v731, %v754
    %vm765 = vcmp.ge.f32.partialorder %v732, %v754
    %vm766 = vcmp.ge.f32.partialorder %v733, %v754
    %vm767 = vcmp.ge.f32.partialorder %v734, %v755
    %vm768 = vcmp.ge.f32.partialorder %v735, %v755
    %vm769 = vcmp.ge.f32.partialorder %v736, %v755
    %vm770 = vcmp.ge.f32.partialorder %v737, %v755
    %v771 = vsel %vm763, -inf, %v730
    %v772 = vsel %vm764, -inf, %v731
    %v773 = vsel %vm765, -inf, %v732
    %v774 = vsel %vm766, -inf, %v733
    %v775 = vsel %vm767, -inf, %v734
    %v776 = vsel %vm768, -inf, %v735
    %v777 = vsel %vm769, -inf, %v736
    %v778 = vsel %vm770, -inf, %v737
    %v779 = vsel %vm105, %v761, -inf
    %780 = vmax.xlane.f32.xlu0 %v779
    %v781 = vpop.xlane.xlu0 %780
    %v782 = vsel %vm105, %v762, -inf
    %783 = vmax.xlane.f32.xlu0 %v782
    %v784 = vpop.xlane.xlu0 %783
    %v785 = vmax.f32 %v771, %v773
    %v786 = vmax.f32 %v772, %v774
    %v787 = vmax.f32 %v785, %v786
    %788 = vmax.xlane.f32.xlu0 %v787
    %v789 = vpop.xlane.xlu0 %788
    %v790 = vmax.f32 %v775, %v777
    %v791 = vmax.f32 %v776, %v778
    %v792 = vmax.f32 %v790, %v791
    %793 = vmax.xlane.f32.xlu0 %v792
    %v794 = vpop.xlane.xlu0 %793
    %v795 = vmax.f32 %v781, %v789
    %v796 = vmax.f32 %v784, %v794
    %vm797 = vcmask 121968
    %798 = vst.msk [vmem:[#allocation2] sm:$0xff] %vm797, %v795
    %799 = vst.msk [vmem:[#allocation2 + $0x8] sm:$0xff] %vm797, %v796
    %vm800 = vcmp.ge.f32.partialorder %v761, %v795
    %vm801 = vcmp.ge.f32.partialorder %v762, %v796
    %v802 = vsel %vm800, -inf, %v761
    %v803 = vsel %vm801, -inf, %v762
    %vm804 = vcmp.ge.f32.partialorder %v771, %v795
    %vm805 = vcmp.ge.f32.partialorder %v772, %v795
    %vm806 = vcmp.ge.f32.partialorder %v773, %v795
    %vm807 = vcmp.ge.f32.partialorder %v774, %v795
    %vm808 = vcmp.ge.f32.partialorder %v775, %v796
    %vm809 = vcmp.ge.f32.partialorder %v776, %v796
    %vm810 = vcmp.ge.f32.partialorder %v777, %v796
    %vm811 = vcmp.ge.f32.partialorder %v778, %v796
    %v812 = vsel %vm804, -inf, %v771
    %v813 = vsel %vm805, -inf, %v772
    %v814 = vsel %vm806, -inf, %v773
    %v815 = vsel %vm807, -inf, %v774
    %v816 = vsel %vm808, -inf, %v775
    %v817 = vsel %vm809, -inf, %v776
    %v818 = vsel %vm810, -inf, %v777
    %v819 = vsel %vm811, -inf, %v778
    %v820 = vsel %vm105, %v802, -inf
    %821 = vmax.xlane.f32.xlu0 %v820
    %v822 = vpop.xlane.xlu0 %821
    %v823 = vsel %vm105, %v803, -inf
    %824 = vmax.xlane.f32.xlu0 %v823
    %v825 = vpop.xlane.xlu0 %824
    %v826 = vmax.f32 %v812, %v814
    %v827 = vmax.f32 %v813, %v815
    %v828 = vmax.f32 %v826, %v827
    %829 = vmax.xlane.f32.xlu0 %v828
    %v830 = vpop.xlane.xlu0 %829
    %v831 = vmax.f32 %v816, %v818
    %v832 = vmax.f32 %v817, %v819
    %v833 = vmax.f32 %v831, %v832
    %834 = vmax.xlane.f32.xlu0 %v833
    %v835 = vpop.xlane.xlu0 %834
    %v836 = vmax.f32 %v822, %v830
    %v837 = vmax.f32 %v825, %v835
    %vm838 = vcmask 130168
    %839 = vst.msk [vmem:[#allocation2] sm:$0xff] %vm838, %v836
    %840 = vst.msk [vmem:[#allocation2 + $0x8] sm:$0xff] %vm838, %v837
    %vm841 = vcmp.ge.f32.partialorder %v802, %v836
    %vm842 = vcmp.ge.f32.partialorder %v803, %v837
    %v843 = vsel %vm841, -inf, %v802
    %v844 = vsel %vm842, -inf, %v803
    %vm845 = vcmp.ge.f32.partialorder %v812, %v836
    %vm846 = vcmp.ge.f32.partialorder %v813, %v836
    %vm847 = vcmp.ge.f32.partialorder %v814, %v836
    %vm848 = vcmp.ge.f32.partialorder %v815, %v836
    %vm849 = vcmp.ge.f32.partialorder %v816, %v837
    %vm850 = vcmp.ge.f32.partialorder %v817, %v837
    %vm851 = vcmp.ge.f32.partialorder %v818, %v837
    %vm852 = vcmp.ge.f32.partialorder %v819, %v837
    %v853 = vsel %vm845, -inf, %v812
    %v854 = vsel %vm846, -inf, %v813
    %v855 = vsel %vm847, -inf, %v814
    %v856 = vsel %vm848, -inf, %v815
    %v857 = vsel %vm849, -inf, %v816
    %v858 = vsel %vm850, -inf, %v817
    %v859 = vsel %vm851, -inf, %v818
    %v860 = vsel %vm852, -inf, %v819
    %v861 = vsel %vm105, %v843, -inf
    %862 = vmax.xlane.f32.xlu0 %v861
    %v863 = vpop.xlane.xlu0 %862
    %v864 = vsel %vm105, %v844, -inf
    %865 = vmax.xlane.f32.xlu0 %v864
    %v866 = vpop.xlane.xlu0 %865
    %v867 = vmax.f32 %v853, %v855
    %v868 = vmax.f32 %v854, %v856
    %v869 = vmax.f32 %v867, %v868
    %870 = vmax.xlane.f32.xlu0 %v869
    %v871 = vpop.xlane.xlu0 %870
    %v872 = vmax.f32 %v857, %v859
    %v873 = vmax.f32 %v858, %v860
    %v874 = vmax.f32 %v872, %v873
    %875 = vmax.xlane.f32.xlu0 %v874
    %v876 = vpop.xlane.xlu0 %875
    %v877 = vmax.f32 %v863, %v871
    %v878 = vmax.f32 %v866, %v876
    %vm879 = vcmask 138368
    %880 = vst.msk [vmem:[#allocation2] sm:$0xff] %vm879, %v877
    %881 = vst.msk [vmem:[#allocation2 + $0x8] sm:$0xff] %vm879, %v878
    %vm882 = vcmp.ge.f32.partialorder %v843, %v877
    %vm883 = vcmp.ge.f32.partialorder %v844, %v878
    %v884 = vsel %vm882, -inf, %v843
    %v885 = vsel %vm883, -inf, %v844
    %vm886 = vcmp.ge.f32.partialorder %v853, %v877
    %vm887 = vcmp.ge.f32.partialorder %v854, %v877
    %vm888 = vcmp.ge.f32.partialorder %v855, %v877
    %vm889 = vcmp.ge.f32.partialorder %v856, %v877
    %vm890 = vcmp.ge.f32.partialorder %v857, %v878
    %vm891 = vcmp.ge.f32.partialorder %v858, %v878
    %vm892 = vcmp.ge.f32.partialorder %v859, %v878
    %vm893 = vcmp.ge.f32.partialorder %v860, %v878
    %v894 = vsel %vm886, -inf, %v853
    %v895 = vsel %vm887, -inf, %v854
    %v896 = vsel %vm888, -inf, %v855
    %v897 = vsel %vm889, -inf, %v856
    %v898 = vsel %vm890, -inf, %v857
    %v899 = vsel %vm891, -inf, %v858
    %v900 = vsel %vm892, -inf, %v859
    %v901 = vsel %vm893, -inf, %v860
    %v902 = vsel %vm105, %v884, -inf
    %903 = vmax.xlane.f32.xlu0 %v902
    %v904 = vpop.xlane.xlu0 %903
    %v905 = vsel %vm105, %v885, -inf
    %906 = vmax.xlane.f32.xlu0 %v905
    %v907 = vpop.xlane.xlu0 %906
    %v908 = vmax.f32 %v894, %v896
    %v909 = vmax.f32 %v895, %v897
    %v910 = vmax.f32 %v908, %v909
    %911 = vmax.xlane.f32.xlu0 %v910
    %v912 = vpop.xlane.xlu0 %911
    %v913 = vmax.f32 %v898, %v900
    %v914 = vmax.f32 %v899, %v901
    %v915 = vmax.f32 %v913, %v914
    %916 = vmax.xlane.f32.xlu0 %v915
    %v917 = vpop.xlane.xlu0 %916
    %v918 = vmax.f32 %v904, %v912
    %v919 = vmax.f32 %v907, %v917
    %vm920 = vcmask 146568
    %921 = vst.msk [vmem:[#allocation2] sm:$0xff] %vm920, %v918
    %922 = vst.msk [vmem:[#allocation2 + $0x8] sm:$0xff] %vm920, %v919
    %vm923 = vcmp.ge.f32.partialorder %v884, %v918
    %vm924 = vcmp.ge.f32.partialorder %v885, %v919
    %v925 = vsel %vm923, -inf, %v884
    %v926 = vsel %vm924, -inf, %v885
    %vm927 = vcmp.ge.f32.partialorder %v894, %v918
    %vm928 = vcmp.ge.f32.partialorder %v895, %v918
    %vm929 = vcmp.ge.f32.partialorder %v896, %v918
    %vm930 = vcmp.ge.f32.partialorder %v897, %v918
    %vm931 = vcmp.ge.f32.partialorder %v898, %v919
    %vm932 = vcmp.ge.f32.partialorder %v899, %v919
    %vm933 = vcmp.ge.f32.partialorder %v900, %v919
    %vm934 = vcmp.ge.f32.partialorder %v901, %v919
    %v935 = vsel %vm927, -inf, %v894
    %v936 = vsel %vm928, -inf, %v895
    %v937 = vsel %vm929, -inf, %v896
    %v938 = vsel %vm930, -inf, %v897
    %v939 = vsel %vm931, -inf, %v898
    %v940 = vsel %vm932, -inf, %v899
    %v941 = vsel %vm933, -inf, %v900
    %v942 = vsel %vm934, -inf, %v901
    %v943 = vsel %vm105, %v925, -inf
    %944 = vmax.xlane.f32.xlu0 %v943
    %v945 = vpop.xlane.xlu0 %944
    %v946 = vsel %vm105, %v926, -inf
    %947 = vmax.xlane.f32.xlu0 %v946
    %v948 = vpop.xlane.xlu0 %947
    %v949 = vmax.f32 %v935, %v937
    %v950 = vmax.f32 %v936, %v938
    %v951 = vmax.f32 %v949, %v950
    %952 = vmax.xlane.f32.xlu0 %v951
    %v953 = vpop.xlane.xlu0 %952
    %v954 = vmax.f32 %v939, %v941
    %v955 = vmax.f32 %v940, %v942
    %v956 = vmax.f32 %v954, %v955
    %957 = vmax.xlane.f32.xlu0 %v956
    %v958 = vpop.xlane.xlu0 %957
    %v959 = vmax.f32 %v945, %v953
    %v960 = vmax.f32 %v948, %v958
    %vm961 = vcmask 154768
    %962 = vst.msk [vmem:[#allocation2] sm:$0xff] %vm961, %v959
    %963 = vst.msk [vmem:[#allocation2 + $0x8] sm:$0xff] %vm961, %v960
    %vm964 = vcmp.ge.f32.partialorder %v925, %v959
    %vm965 = vcmp.ge.f32.partialorder %v926, %v960
    %v966 = vsel %vm964, -inf, %v925
    %v967 = vsel %vm965, -inf, %v926
    %vm968 = vcmp.ge.f32.partialorder %v935, %v959
    %vm969 = vcmp.ge.f32.partialorder %v936, %v959
    %vm970 = vcmp.ge.f32.partialorder %v937, %v959
    %vm971 = vcmp.ge.f32.partialorder %v938, %v959
    %vm972 = vcmp.ge.f32.partialorder %v939, %v960
    %vm973 = vcmp.ge.f32.partialorder %v940, %v960
    %vm974 = vcmp.ge.f32.partialorder %v941, %v960
    %vm975 = vcmp.ge.f32.partialorder %v942, %v960
    %v976 = vsel %vm968, -inf, %v935
    %v977 = vsel %vm969, -inf, %v936
    %v978 = vsel %vm970, -inf, %v937
    %v979 = vsel %vm971, -inf, %v938
    %v980 = vsel %vm972, -inf, %v939
    %v981 = vsel %vm973, -inf, %v940
    %v982 = vsel %vm974, -inf, %v941
    %v983 = vsel %vm975, -inf, %v942
    %v984 = vsel %vm105, %v966, -inf
    %985 = vmax.xlane.f32.xlu0 %v984
    %v986 = vpop.xlane.xlu0 %985
    %v987 = vsel %vm105, %v967, -inf
    %988 = vmax.xlane.f32.xlu0 %v987
    %v989 = vpop.xlane.xlu0 %988
    %v990 = vmax.f32 %v976, %v978
    %v991 = vmax.f32 %v977, %v979
    %v992 = vmax.f32 %v990, %v991
    %993 = vmax.xlane.f32.xlu0 %v992
    %v994 = vpop.xlane.xlu0 %993
    %v995 = vmax.f32 %v980, %v982
    %v996 = vmax.f32 %v981, %v983
    %v997 = vmax.f32 %v995, %v996
    %998 = vmax.xlane.f32.xlu0 %v997
    %v999 = vpop.xlane.xlu0 %998
    %v1000 = vmax.f32 %v986, %v994
    %v1001 = vmax.f32 %v989, %v999
    %vm1002 = vcmask 162968
    %1003 = vst.msk [vmem:[#allocation2] sm:$0xff] %vm1002, %v1000
    %1004 = vst.msk [vmem:[#allocation2 + $0x8] sm:$0xff] %vm1002, %v1001
    %vm1005 = vcmp.ge.f32.partialorder %v966, %v1000
    %vm1006 = vcmp.ge.f32.partialorder %v967, %v1001
    %v1007 = vsel %vm1005, -inf, %v966
    %v1008 = vsel %vm1006, -inf, %v967
    %vm1009 = vcmp.ge.f32.partialorder %v976, %v1000
    %vm1010 = vcmp.ge.f32.partialorder %v977, %v1000
    %vm1011 = vcmp.ge.f32.partialorder %v978, %v1000
    %vm1012 = vcmp.ge.f32.partialorder %v979, %v1000
    %vm1013 = vcmp.ge.f32.partialorder %v980, %v1001
    %vm1014 = vcmp.ge.f32.partialorder %v981, %v1001
    %vm1015 = vcmp.ge.f32.partialorder %v982, %v1001
    %vm1016 = vcmp.ge.f32.partialorder %v983, %v1001
    %v1017 = vsel %vm1009, -inf, %v976
    %v1018 = vsel %vm1010, -inf, %v977
    %v1019 = vsel %vm1011, -inf, %v978
    %v1020 = vsel %vm1012, -inf, %v979
    %v1021 = vsel %vm1013, -inf, %v980
    %v1022 = vsel %vm1014, -inf, %v981
    %v1023 = vsel %vm1015, -inf, %v982
    %v1024 = vsel %vm1016, -inf, %v983
    %v1025 = vsel %vm105, %v1007, -inf
    %1026 = vmax.xlane.f32.xlu0 %v1025
    %v1027 = vpop.xlane.xlu0 %1026
    %v1028 = vsel %vm105, %v1008, -inf
    %1029 = vmax.xlane.f32.xlu0 %v1028
    %v1030 = vpop.xlane.xlu0 %1029
    %v1031 = vmax.f32 %v1017, %v1019
    %v1032 = vmax.f32 %v1018, %v1020
    %v1033 = vmax.f32 %v1031, %v1032
    %1034 = vmax.xlane.f32.xlu0 %v1033
    %v1035 = vpop.xlane.xlu0 %1034
    %v1036 = vmax.f32 %v1021, %v1023
    %v1037 = vmax.f32 %v1022, %v1024
    %v1038 = vmax.f32 %v1036, %v1037
    %1039 = vmax.xlane.f32.xlu0 %v1038
    %v1040 = vpop.xlane.xlu0 %1039
    %v1041 = vmax.f32 %v1027, %v1035
    %v1042 = vmax.f32 %v1030, %v1040
    %vm1043 = vcmask 171168
    %1044 = vst.msk [vmem:[#allocation2] sm:$0xff] %vm1043, %v1041
    %1045 = vst.msk [vmem:[#allocation2 + $0x8] sm:$0xff] %vm1043, %v1042
    %vm1046 = vcmp.ge.f32.partialorder %v1007, %v1041
    %vm1047 = vcmp.ge.f32.partialorder %v1008, %v1042
    %v1048 = vsel %vm1046, -inf, %v1007
    %v1049 = vsel %vm1047, -inf, %v1008
    %vm1050 = vcmp.ge.f32.partialorder %v1017, %v1041
    %vm1051 = vcmp.ge.f32.partialorder %v1018, %v1041
    %vm1052 = vcmp.ge.f32.partialorder %v1019, %v1041
    %vm1053 = vcmp.ge.f32.partialorder %v1020, %v1041
    %vm1054 = vcmp.ge.f32.partialorder %v1021, %v1042
    %vm1055 = vcmp.ge.f32.partialorder %v1022, %v1042
    %vm1056 = vcmp.ge.f32.partialorder %v1023, %v1042
    %vm1057 = vcmp.ge.f32.partialorder %v1024, %v1042
    %v1058 = vsel %vm1050, -inf, %v1017
    %v1059 = vsel %vm1051, -inf, %v1018
    %v1060 = vsel %vm1052, -inf, %v1019
    %v1061 = vsel %vm1053, -inf, %v1020
    %v1062 = vsel %vm1054, -inf, %v1021
    %v1063 = vsel %vm1055, -inf, %v1022
    %v1064 = vsel %vm1056, -inf, %v1023
    %v1065 = vsel %vm1057, -inf, %v1024
    %v1066 = vsel %vm105, %v1048, -inf
    %1067 = vmax.xlane.f32.xlu0 %v1066
    %v1068 = vpop.xlane.xlu0 %1067
    %v1069 = vsel %vm105, %v1049, -inf
    %1070 = vmax.xlane.f32.xlu0 %v1069
    %v1071 = vpop.xlane.xlu0 %1070
    %v1072 = vmax.f32 %v1058, %v1060
    %v1073 = vmax.f32 %v1059, %v1061
    %v1074 = vmax.f32 %v1072, %v1073
    %1075 = vmax.xlane.f32.xlu0 %v1074
    %v1076 = vpop.xlane.xlu0 %1075
    %v1077 = vmax.f32 %v1062, %v1064
    %v1078 = vmax.f32 %v1063, %v1065
    %v1079 = vmax.f32 %v1077, %v1078
    %1080 = vmax.xlane.f32.xlu0 %v1079
    %v1081 = vpop.xlane.xlu0 %1080
    %v1082 = vmax.f32 %v1068, %v1076
    %v1083 = vmax.f32 %v1071, %v1081
    %vm1084 = vcmask 179368
    %1085 = vst.msk [vmem:[#allocation2] sm:$0xff] %vm1084, %v1082
    %1086 = vst.msk [vmem:[#allocation2 + $0x8] sm:$0xff] %vm1084, %v1083
    %vm1087 = vcmp.ge.f32.partialorder %v1048, %v1082
    %vm1088 = vcmp.ge.f32.partialorder %v1049, %v1083
    %v1089 = vsel %vm1087, -inf, %v1048
    %v1090 = vsel %vm1088, -inf, %v1049
    %vm1091 = vcmp.ge.f32.partialorder %v1058, %v1082
    %vm1092 = vcmp.ge.f32.partialorder %v1059, %v1082
    %vm1093 = vcmp.ge.f32.partialorder %v1060, %v1082
    %vm1094 = vcmp.ge.f32.partialorder %v1061, %v1082
    %vm1095 = vcmp.ge.f32.partialorder %v1062, %v1083
    %vm1096 = vcmp.ge.f32.partialorder %v1063, %v1083
    %vm1097 = vcmp.ge.f32.partialorder %v1064, %v1083
    %vm1098 = vcmp.ge.f32.partialorder %v1065, %v1083
    %v1099 = vsel %vm1091, -inf, %v1058
    %v1100 = vsel %vm1092, -inf, %v1059
    %v1101 = vsel %vm1093, -inf, %v1060
    %v1102 = vsel %vm1094, -inf, %v1061
    %v1103 = vsel %vm1095, -inf, %v1062
    %v1104 = vsel %vm1096, -inf, %v1063
    %v1105 = vsel %vm1097, -inf, %v1064
    %v1106 = vsel %vm1098, -inf, %v1065
    %v1107 = vsel %vm105, %v1089, -inf
    %1108 = vmax.xlane.f32.xlu0 %v1107
    %v1109 = vpop.xlane.xlu0 %1108
    %v1110 = vsel %vm105, %v1090, -inf
    %1111 = vmax.xlane.f32.xlu0 %v1110
    %v1112 = vpop.xlane.xlu0 %1111
    %v1113 = vmax.f32 %v1099, %v1101
    %v1114 = vmax.f32 %v1100, %v1102
    %v1115 = vmax.f32 %v1113, %v1114
    %1116 = vmax.xlane.f32.xlu0 %v1115
    %v1117 = vpop.xlane.xlu0 %1116
    %v1118 = vmax.f32 %v1103, %v1105
    %v1119 = vmax.f32 %v1104, %v1106
    %v1120 = vmax.f32 %v1118, %v1119
    %1121 = vmax.xlane.f32.xlu0 %v1120
    %v1122 = vpop.xlane.xlu0 %1121
    %v1123 = vmax.f32 %v1109, %v1117
    %v1124 = vmax.f32 %v1112, %v1122
    %vm1125 = vcmask 187568
    %1126 = vst.msk [vmem:[#allocation2] sm:$0xff] %vm1125, %v1123
    %1127 = vst.msk [vmem:[#allocation2 + $0x8] sm:$0xff] %vm1125, %v1124
    %vm1128 = vcmp.ge.f32.partialorder %v1089, %v1123
    %vm1129 = vcmp.ge.f32.partialorder %v1090, %v1124
    %v1130 = vsel %vm1128, -inf, %v1089
    %v1131 = vsel %vm1129, -inf, %v1090
    %vm1132 = vcmp.ge.f32.partialorder %v1099, %v1123
    %vm1133 = vcmp.ge.f32.partialorder %v1100, %v1123
    %vm1134 = vcmp.ge.f32.partialorder %v1101, %v1123
    %vm1135 = vcmp.ge.f32.partialorder %v1102, %v1123
    %vm1136 = vcmp.ge.f32.partialorder %v1103, %v1124
    %vm1137 = vcmp.ge.f32.partialorder %v1104, %v1124
    %vm1138 = vcmp.ge.f32.partialorder %v1105, %v1124
    %vm1139 = vcmp.ge.f32.partialorder %v1106, %v1124
    %v1140 = vsel %vm1132, -inf, %v1099
    %v1141 = vsel %vm1133, -inf, %v1100
    %v1142 = vsel %vm1134, -inf, %v1101
    %v1143 = vsel %vm1135, -inf, %v1102
    %v1144 = vsel %vm1136, -inf, %v1103
    %v1145 = vsel %vm1137, -inf, %v1104
    %v1146 = vsel %vm1138, -inf, %v1105
    %v1147 = vsel %vm1139, -inf, %v1106
    %v1148 = vsel %vm105, %v1130, -inf
    %1149 = vmax.xlane.f32.xlu0 %v1148
    %v1150 = vpop.xlane.xlu0 %1149
    %v1151 = vsel %vm105, %v1131, -inf
    %1152 = vmax.xlane.f32.xlu0 %v1151
    %v1153 = vpop.xlane.xlu0 %1152
    %v1154 = vmax.f32 %v1140, %v1142
    %v1155 = vmax.f32 %v1141, %v1143
    %v1156 = vmax.f32 %v1154, %v1155
    %1157 = vmax.xlane.f32.xlu0 %v1156
    %v1158 = vpop.xlane.xlu0 %1157
    %v1159 = vmax.f32 %v1144, %v1146
    %v1160 = vmax.f32 %v1145, %v1147
    %v1161 = vmax.f32 %v1159, %v1160
    %1162 = vmax.xlane.f32.xlu0 %v1161
    %v1163 = vpop.xlane.xlu0 %1162
    %v1164 = vmax.f32 %v1150, %v1158
    %v1165 = vmax.f32 %v1153, %v1163
    %vm1166 = vcmask 195768
    %1167 = vst.msk [vmem:[#allocation2] sm:$0xff] %vm1166, %v1164
    %1168 = vst.msk [vmem:[#allocation2 + $0x8] sm:$0xff] %vm1166, %v1165
    %vm1169 = vcmp.ge.f32.partialorder %v1130, %v1164
    %vm1170 = vcmp.ge.f32.partialorder %v1131, %v1165
    %v1171 = vsel %vm1169, -inf, %v1130
    %v1172 = vsel %vm1170, -inf, %v1131
    %vm1173 = vcmp.ge.f32.partialorder %v1140, %v1164
    %vm1174 = vcmp.ge.f32.partialorder %v1141, %v1164
    %vm1175 = vcmp.ge.f32.partialorder %v1142, %v1164
    %vm1176 = vcmp.ge.f32.partialorder %v1143, %v1164
    %vm1177 = vcmp.ge.f32.partialorder %v1144, %v1165
    %vm1178 = vcmp.ge.f32.partialorder %v1145, %v1165
    %vm1179 = vcmp.ge.f32.partialorder %v1146, %v1165
    %vm1180 = vcmp.ge.f32.partialorder %v1147, %v1165
    %v1181 = vsel %vm1173, -inf, %v1140
    %v1182 = vsel %vm1174, -inf, %v1141
    %v1183 = vsel %vm1175, -inf, %v1142
    %v1184 = vsel %vm1176, -inf, %v1143
    %v1185 = vsel %vm1177, -inf, %v1144
    %v1186 = vsel %vm1178, -inf, %v1145
    %v1187 = vsel %vm1179, -inf, %v1146
    %v1188 = vsel %vm1180, -inf, %v1147
    %v1189 = vsel %vm105, %v1171, -inf
    %1190 = vmax.xlane.f32.xlu0 %v1189
    %v1191 = vpop.xlane.xlu0 %1190
    %v1192 = vsel %vm105, %v1172, -inf
    %1193 = vmax.xlane.f32.xlu0 %v1192
    %v1194 = vpop.xlane.xlu0 %1193
    %v1195 = vmax.f32 %v1181, %v1183
    %v1196 = vmax.f32 %v1182, %v1184
    %v1197 = vmax.f32 %v1195, %v1196
    %1198 = vmax.xlane.f32.xlu0 %v1197
    %v1199 = vpop.xlane.xlu0 %1198
    %v1200 = vmax.f32 %v1185, %v1187
    %v1201 = vmax.f32 %v1186, %v1188
    %v1202 = vmax.f32 %v1200, %v1201
    %1203 = vmax.xlane.f32.xlu0 %v1202
    %v1204 = vpop.xlane.xlu0 %1203
    %v1205 = vmax.f32 %v1191, %v1199
    %v1206 = vmax.f32 %v1194, %v1204
    %vm1207 = vcmask 203968
    %1208 = vst.msk [vmem:[#allocation2] sm:$0xff] %vm1207, %v1205
    %1209 = vst.msk [vmem:[#allocation2 + $0x8] sm:$0xff] %vm1207, %v1206
    %vm1210 = vcmp.ge.f32.partialorder %v1171, %v1205
    %vm1211 = vcmp.ge.f32.partialorder %v1172, %v1206
    %v1212 = vsel %vm1210, -inf, %v1171
    %v1213 = vsel %vm1211, -inf, %v1172
    %vm1214 = vcmp.ge.f32.partialorder %v1181, %v1205
    %vm1215 = vcmp.ge.f32.partialorder %v1182, %v1205
    %vm1216 = vcmp.ge.f32.partialorder %v1183, %v1205
    %vm1217 = vcmp.ge.f32.partialorder %v1184, %v1205
    %vm1218 = vcmp.ge.f32.partialorder %v1185, %v1206
    %vm1219 = vcmp.ge.f32.partialorder %v1186, %v1206
    %vm1220 = vcmp.ge.f32.partialorder %v1187, %v1206
    %vm1221 = vcmp.ge.f32.partialorder %v1188, %v1206
    %v1222 = vsel %vm1214, -inf, %v1181
    %v1223 = vsel %vm1215, -inf, %v1182
    %v1224 = vsel %vm1216, -inf, %v1183
    %v1225 = vsel %vm1217, -inf, %v1184
    %v1226 = vsel %vm1218, -inf, %v1185
    %v1227 = vsel %vm1219, -inf, %v1186
    %v1228 = vsel %vm1220, -inf, %v1187
    %v1229 = vsel %vm1221, -inf, %v1188
    %v1230 = vsel %vm105, %v1212, -inf
    %1231 = vmax.xlane.f32.xlu0 %v1230
    %v1232 = vpop.xlane.xlu0 %1231
    %v1233 = vsel %vm105, %v1213, -inf
    %1234 = vmax.xlane.f32.xlu0 %v1233
    %v1235 = vpop.xlane.xlu0 %1234
    %v1236 = vmax.f32 %v1222, %v1224
    %v1237 = vmax.f32 %v1223, %v1225
    %v1238 = vmax.f32 %v1236, %v1237
    %1239 = vmax.xlane.f32.xlu0 %v1238
    %v1240 = vpop.xlane.xlu0 %1239
    %v1241 = vmax.f32 %v1226, %v1228
    %v1242 = vmax.f32 %v1227, %v1229
    %v1243 = vmax.f32 %v1241, %v1242
    %1244 = vmax.xlane.f32.xlu0 %v1243
    %v1245 = vpop.xlane.xlu0 %1244
    %v1246 = vmax.f32 %v1232, %v1240
    %v1247 = vmax.f32 %v1235, %v1245
    %vm1248 = vcmask 212168
    %1249 = vst.msk [vmem:[#allocation2] sm:$0xff] %vm1248, %v1246
    %1250 = vst.msk [vmem:[#allocation2 + $0x8] sm:$0xff] %vm1248, %v1247
    %vm1251 = vcmp.ge.f32.partialorder %v1212, %v1246
    %vm1252 = vcmp.ge.f32.partialorder %v1213, %v1247
    %v1253 = vsel %vm1251, -inf, %v1212
    %v1254 = vsel %vm1252, -inf, %v1213
    %vm1255 = vcmp.ge.f32.partialorder %v1222, %v1246
    %vm1256 = vcmp.ge.f32.partialorder %v1223, %v1246
    %vm1257 = vcmp.ge.f32.partialorder %v1224, %v1246
    %vm1258 = vcmp.ge.f32.partialorder %v1225, %v1246
    %vm1259 = vcmp.ge.f32.partialorder %v1226, %v1247
    %vm1260 = vcmp.ge.f32.partialorder %v1227, %v1247
    %vm1261 = vcmp.ge.f32.partialorder %v1228, %v1247
    %vm1262 = vcmp.ge.f32.partialorder %v1229, %v1247
    %v1263 = vsel %vm1255, -inf, %v1222
    %v1264 = vsel %vm1256, -inf, %v1223
    %v1265 = vsel %vm1257, -inf, %v1224
    %v1266 = vsel %vm1258, -inf, %v1225
    %v1267 = vsel %vm1259, -inf, %v1226
    %v1268 = vsel %vm1260, -inf, %v1227
    %v1269 = vsel %vm1261, -inf, %v1228
    %v1270 = vsel %vm1262, -inf, %v1229
    %v1271 = vsel %vm105, %v1253, -inf
    %1272 = vmax.xlane.f32.xlu0 %v1271
    %v1273 = vpop.xlane.xlu0 %1272
    %v1274 = vsel %vm105, %v1254, -inf
    %1275 = vmax.xlane.f32.xlu0 %v1274
    %v1276 = vpop.xlane.xlu0 %1275
    %v1277 = vmax.f32 %v1263, %v1265
    %v1278 = vmax.f32 %v1264, %v1266
    %v1279 = vmax.f32 %v1277, %v1278
    %1280 = vmax.xlane.f32.xlu0 %v1279
    %v1281 = vpop.xlane.xlu0 %1280
    %v1282 = vmax.f32 %v1267, %v1269
    %v1283 = vmax.f32 %v1268, %v1270
    %v1284 = vmax.f32 %v1282, %v1283
    %1285 = vmax.xlane.f32.xlu0 %v1284
    %v1286 = vpop.xlane.xlu0 %1285
    %v1287 = vmax.f32 %v1273, %v1281
    %v1288 = vmax.f32 %v1276, %v1286
    %vm1289 = vcmask 220368
    %1290 = vst.msk [vmem:[#allocation2] sm:$0xff] %vm1289, %v1287
    %1291 = vst.msk [vmem:[#allocation2 + $0x8] sm:$0xff] %vm1289, %v1288
    %vm1292 = vcmp.ge.f32.partialorder %v1253, %v1287
    %vm1293 = vcmp.ge.f32.partialorder %v1254, %v1288
    %v1294 = vsel %vm1292, -inf, %v1253
    %v1295 = vsel %vm1293, -inf, %v1254
    %vm1296 = vcmp.ge.f32.partialorder %v1263, %v1287
    %vm1297 = vcmp.ge.f32.partialorder %v1264, %v1287
    %vm1298 = vcmp.ge.f32.partialorder %v1265, %v1287
    %vm1299 = vcmp.ge.f32.partialorder %v1266, %v1287
    %vm1300 = vcmp.ge.f32.partialorder %v1267, %v1288
    %vm1301 = vcmp.ge.f32.partialorder %v1268, %v1288
    %vm1302 = vcmp.ge.f32.partialorder %v1269, %v1288
    %vm1303 = vcmp.ge.f32.partialorder %v1270, %v1288
    %v1304 = vsel %vm1296, -inf, %v1263
    %v1305 = vsel %vm1297, -inf, %v1264
    %v1306 = vsel %vm1298, -inf, %v1265
    %v1307 = vsel %vm1299, -inf, %v1266
    %v1308 = vsel %vm1300, -inf, %v1267
    %v1309 = vsel %vm1301, -inf, %v1268
    %v1310 = vsel %vm1302, -inf, %v1269
    %v1311 = vsel %vm1303, -inf, %v1270
    %v1312 = vsel %vm105, %v1294, -inf
    %1313 = vmax.xlane.f32.xlu0 %v1312
    %v1314 = vpop.xlane.xlu0 %1313
    %v1315 = vsel %vm105, %v1295, -inf
    %1316 = vmax.xlane.f32.xlu0 %v1315
    %v1317 = vpop.xlane.xlu0 %1316
    %v1318 = vmax.f32 %v1304, %v1306
    %v1319 = vmax.f32 %v1305, %v1307
    %v1320 = vmax.f32 %v1318, %v1319
    %1321 = vmax.xlane.f32.xlu0 %v1320
    %v1322 = vpop.xlane.xlu0 %1321
    %v1323 = vmax.f32 %v1308, %v1310
    %v1324 = vmax.f32 %v1309, %v1311
    %v1325 = vmax.f32 %v1323, %v1324
    %1326 = vmax.xlane.f32.xlu0 %v1325
    %v1327 = vpop.xlane.xlu0 %1326
    %v1328 = vmax.f32 %v1314, %v1322
    %v1329 = vmax.f32 %v1317, %v1327
    %vm1330 = vcmask 228568
    %1331 = vst.msk [vmem:[#allocation2] sm:$0xff] %vm1330, %v1328
    %1332 = vst.msk [vmem:[#allocation2 + $0x8] sm:$0xff] %vm1330, %v1329
    %vm1333 = vcmp.ge.f32.partialorder %v1294, %v1328
    %vm1334 = vcmp.ge.f32.partialorder %v1295, %v1329
    %v1335 = vsel %vm1333, -inf, %v1294
    %v1336 = vsel %vm1334, -inf, %v1295
    %vm1337 = vcmp.ge.f32.partialorder %v1304, %v1328
    %vm1338 = vcmp.ge.f32.partialorder %v1305, %v1328
    %vm1339 = vcmp.ge.f32.partialorder %v1306, %v1328
    %vm1340 = vcmp.ge.f32.partialorder %v1307, %v1328
    %vm1341 = vcmp.ge.f32.partialorder %v1308, %v1329
    %vm1342 = vcmp.ge.f32.partialorder %v1309, %v1329
    %vm1343 = vcmp.ge.f32.partialorder %v1310, %v1329
    %vm1344 = vcmp.ge.f32.partialorder %v1311, %v1329
    %v1345 = vsel %vm1337, -inf, %v1304
    %v1346 = vsel %vm1338, -inf, %v1305
    %v1347 = vsel %vm1339, -inf, %v1306
    %v1348 = vsel %vm1340, -inf, %v1307
    %v1349 = vsel %vm1341, -inf, %v1308
    %v1350 = vsel %vm1342, -inf, %v1309
    %v1351 = vsel %vm1343, -inf, %v1310
    %v1352 = vsel %vm1344, -inf, %v1311
    %v1353 = vsel %vm105, %v1335, -inf
    %1354 = vmax.xlane.f32.xlu0 %v1353
    %v1355 = vpop.xlane.xlu0 %1354
    %v1356 = vsel %vm105, %v1336, -inf
    %1357 = vmax.xlane.f32.xlu0 %v1356
    %v1358 = vpop.xlane.xlu0 %1357
    %v1359 = vmax.f32 %v1345, %v1347
    %v1360 = vmax.f32 %v1346, %v1348
    %v1361 = vmax.f32 %v1359, %v1360
    %1362 = vmax.xlane.f32.xlu0 %v1361
    %v1363 = vpop.xlane.xlu0 %1362
    %v1364 = vmax.f32 %v1349, %v1351
    %v1365 = vmax.f32 %v1350, %v1352
    %v1366 = vmax.f32 %v1364, %v1365
    %1367 = vmax.xlane.f32.xlu0 %v1366
    %v1368 = vpop.xlane.xlu0 %1367
    %v1369 = vmax.f32 %v1355, %v1363
    %v1370 = vmax.f32 %v1358, %v1368
    %vm1371 = vcmask 236768
    %1372 = vst.msk [vmem:[#allocation2] sm:$0xff] %vm1371, %v1369
    %1373 = vst.msk [vmem:[#allocation2 + $0x8] sm:$0xff] %vm1371, %v1370
    %vm1374 = vcmp.ge.f32.partialorder %v1335, %v1369
    %vm1375 = vcmp.ge.f32.partialorder %v1336, %v1370
    %v1376 = vsel %vm1374, -inf, %v1335
    %v1377 = vsel %vm1375, -inf, %v1336
    %vm1378 = vcmp.ge.f32.partialorder %v1345, %v1369
    %vm1379 = vcmp.ge.f32.partialorder %v1346, %v1369
    %vm1380 = vcmp.ge.f32.partialorder %v1347, %v1369
    %vm1381 = vcmp.ge.f32.partialorder %v1348, %v1369
    %vm1382 = vcmp.ge.f32.partialorder %v1349, %v1370
    %vm1383 = vcmp.ge.f32.partialorder %v1350, %v1370
    %vm1384 = vcmp.ge.f32.partialorder %v1351, %v1370
    %vm1385 = vcmp.ge.f32.partialorder %v1352, %v1370
    %v1386 = vsel %vm1378, -inf, %v1345
    %v1387 = vsel %vm1379, -inf, %v1346
    %v1388 = vsel %vm1380, -inf, %v1347
    %v1389 = vsel %vm1381, -inf, %v1348
    %v1390 = vsel %vm1382, -inf, %v1349
    %v1391 = vsel %vm1383, -inf, %v1350
    %v1392 = vsel %vm1384, -inf, %v1351
    %v1393 = vsel %vm1385, -inf, %v1352
    %v1394 = vsel %vm105, %v1376, -inf
    %1395 = vmax.xlane.f32.xlu0 %v1394
    %v1396 = vpop.xlane.xlu0 %1395
    %v1397 = vsel %vm105, %v1377, -inf
    %1398 = vmax.xlane.f32.xlu0 %v1397
    %v1399 = vpop.xlane.xlu0 %1398
    %v1400 = vmax.f32 %v1386, %v1388
    %v1401 = vmax.f32 %v1387, %v1389
    %v1402 = vmax.f32 %v1400, %v1401
    %1403 = vmax.xlane.f32.xlu0 %v1402
    %v1404 = vpop.xlane.xlu0 %1403
    %v1405 = vmax.f32 %v1390, %v1392
    %v1406 = vmax.f32 %v1391, %v1393
    %v1407 = vmax.f32 %v1405, %v1406
    %1408 = vmax.xlane.f32.xlu0 %v1407
    %v1409 = vpop.xlane.xlu0 %1408
    %v1410 = vmax.f32 %v1396, %v1404
    %v1411 = vmax.f32 %v1399, %v1409
    %vm1412 = vcmask 244968
    %1413 = vst.msk [vmem:[#allocation2] sm:$0xff] %vm1412, %v1410
    %1414 = vst.msk [vmem:[#allocation2 + $0x8] sm:$0xff] %vm1412, %v1411
    %vm1415 = vcmp.ge.f32.partialorder %v1376, %v1410
    %vm1416 = vcmp.ge.f32.partialorder %v1377, %v1411
    %v1417 = vsel %vm1415, -inf, %v1376
    %v1418 = vsel %vm1416, -inf, %v1377
    %vm1419 = vcmp.ge.f32.partialorder %v1386, %v1410
    %vm1420 = vcmp.ge.f32.partialorder %v1387, %v1410
    %vm1421 = vcmp.ge.f32.partialorder %v1388, %v1410
    %vm1422 = vcmp.ge.f32.partialorder %v1389, %v1410
    %vm1423 = vcmp.ge.f32.partialorder %v1390, %v1411
    %vm1424 = vcmp.ge.f32.partialorder %v1391, %v1411
    %vm1425 = vcmp.ge.f32.partialorder %v1392, %v1411
    %vm1426 = vcmp.ge.f32.partialorder %v1393, %v1411
    %v1427 = vsel %vm1419, -inf, %v1386
    %v1428 = vsel %vm1420, -inf, %v1387
    %v1429 = vsel %vm1421, -inf, %v1388
    %v1430 = vsel %vm1422, -inf, %v1389
    %v1431 = vsel %vm1423, -inf, %v1390
    %v1432 = vsel %vm1424, -inf, %v1391
    %v1433 = vsel %vm1425, -inf, %v1392
    %v1434 = vsel %vm1426, -inf, %v1393
    %v1435 = vsel %vm105, %v1417, -inf
    %1436 = vmax.xlane.f32.xlu0 %v1435
    %v1437 = vpop.xlane.xlu0 %1436
    %v1438 = vsel %vm105, %v1418, -inf
    %1439 = vmax.xlane.f32.xlu0 %v1438
    %v1440 = vpop.xlane.xlu0 %1439
    %v1441 = vmax.f32 %v1427, %v1429
    %v1442 = vmax.f32 %v1428, %v1430
    %v1443 = vmax.f32 %v1441, %v1442
    %1444 = vmax.xlane.f32.xlu0 %v1443
    %v1445 = vpop.xlane.xlu0 %1444
    %v1446 = vmax.f32 %v1431, %v1433
    %v1447 = vmax.f32 %v1432, %v1434
    %v1448 = vmax.f32 %v1446, %v1447
    %1449 = vmax.xlane.f32.xlu0 %v1448
    %v1450 = vpop.xlane.xlu0 %1449
    %v1451 = vmax.f32 %v1437, %v1445
    %v1452 = vmax.f32 %v1440, %v1450
    %vm1453 = vcmask 253168
    %1454 = vst.msk [vmem:[#allocation2] sm:$0xff] %vm1453, %v1451
    %1455 = vst.msk [vmem:[#allocation2 + $0x8] sm:$0xff] %vm1453, %v1452
    %vm1456 = vcmp.ge.f32.partialorder %v1417, %v1451
    %vm1457 = vcmp.ge.f32.partialorder %v1418, %v1452
    %v1458 = vsel %vm1456, -inf, %v1417
    %v1459 = vsel %vm1457, -inf, %v1418
    %vm1460 = vcmp.ge.f32.partialorder %v1427, %v1451
    %vm1461 = vcmp.ge.f32.partialorder %v1428, %v1451
    %vm1462 = vcmp.ge.f32.partialorder %v1429, %v1451
    %vm1463 = vcmp.ge.f32.partialorder %v1430, %v1451
    %vm1464 = vcmp.ge.f32.partialorder %v1431, %v1452
    %vm1465 = vcmp.ge.f32.partialorder %v1432, %v1452
    %vm1466 = vcmp.ge.f32.partialorder %v1433, %v1452
    %vm1467 = vcmp.ge.f32.partialorder %v1434, %v1452
    %v1468 = vsel %vm1460, -inf, %v1427
    %v1469 = vsel %vm1461, -inf, %v1428
    %v1470 = vsel %vm1462, -inf, %v1429
    %v1471 = vsel %vm1463, -inf, %v1430
    %v1472 = vsel %vm1464, -inf, %v1431
    %v1473 = vsel %vm1465, -inf, %v1432
    %v1474 = vsel %vm1466, -inf, %v1433
    %v1475 = vsel %vm1467, -inf, %v1434
    %v1476 = vsel %vm105, %v1458, -inf
    %1477 = vmax.xlane.f32.xlu0 %v1476
    %v1478 = vpop.xlane.xlu0 %1477
    %v1479 = vsel %vm105, %v1459, -inf
    %1480 = vmax.xlane.f32.xlu0 %v1479
    %v1481 = vpop.xlane.xlu0 %1480
    %v1482 = vmax.f32 %v1468, %v1470
    %v1483 = vmax.f32 %v1469, %v1471
    %v1484 = vmax.f32 %v1482, %v1483
    %1485 = vmax.xlane.f32.xlu0 %v1484
    %v1486 = vpop.xlane.xlu0 %1485
    %v1487 = vmax.f32 %v1472, %v1474
    %v1488 = vmax.f32 %v1473, %v1475
    %v1489 = vmax.f32 %v1487, %v1488
    %1490 = vmax.xlane.f32.xlu0 %v1489
    %v1491 = vpop.xlane.xlu0 %1490
    %v1492 = vmax.f32 %v1478, %v1486
    %v1493 = vmax.f32 %v1481, %v1491
    %vm1494 = vcmask 261368
    %1495 = vst.msk [vmem:[#allocation2] sm:$0xff] %vm1494, %v1492
    %1496 = vst.msk [vmem:[#allocation2 + $0x8] sm:$0xff] %vm1494, %v1493
    // Predicated region
    $region22: #{tpu_custom_call.1} parent=1 // pred_check
      %p1497 = pneg %p43
    $region23: #{tpu_custom_call.1} parent=1 // pred_check_branch
      %1499 = sbr.rel (%p1497) target = $region25
    $region24: #{tpu_custom_call.1} parent=1 // pred_region
      %v1500 = vld [vmem:[#allocation2] sm:$0xff]
      %v1501 = vld [vmem:[#allocation2 + $0x8] sm:$0xff]
      %v1502 = vsel %vm105, %v1500, inf
      %1503 = vmin.xlane.f32.xlu0 %v1502
      %v1504 = vpop.xlane.xlu0 %1503
      %v1505 = vsel %vm105, %v1501, inf
      %1506 = vmin.xlane.f32.xlu0 %v1505
      %v1507 = vpop.xlane.xlu0 %1506
      %1508 = vst.msk [vmem:[%s3] sm:$0xff] %vm223, %v1504
      %1509 = vst.msk [vmem:[%s3 + $0x8] sm:$0xff] %vm223, %v1507
    $region25: #{tpu_custom_call.1} parent=1 // pred_fallthru
      _
    // Predicated region
    $region26: #{tpu_custom_call.1} parent=1 // pred_check
      _
    $region27: #{tpu_custom_call.1} parent=1 // pred_check_branch
      %1511 = sbr.rel (0) target = $region29
    $region28: #{tpu_custom_call.1} parent=1 // pred_region
      %s1513 = ssub.s32 1024, 1024
      %1514 = vsyncadd [#allocation5], %s1513
      %s1515 = sshll.u32 [#allocation8], 4
      %s1516 = int_to_ptr.vmem [resolvable:$true] %s1515
      %1521 = dma.vmem_to_hbm [thread:$0]  %s1516, 1024, %s2, [#allocation5], 512, 512, 32
    $region29: #{tpu_custom_call.1} parent=1 // pred_fallthru
      _
    // Predicated region
    $region30: #{tpu_custom_call.1} parent=1 // pred_check
      _
    $region31: #{tpu_custom_call.1} parent=1 // pred_check_branch
      %1523 = sbr.rel (0) target = $region33
    $region32: #{tpu_custom_call.1} parent=1 // pred_region
      _
    $region33: #{tpu_custom_call.1} parent=1 // pred_fallthru
      _
    // Predicated region
    $region34: #{tpu_custom_call.1} parent=1 // pred_check
      _
    $region35: #{tpu_custom_call.1} parent=1 // pred_check_branch
      %1525 = sbr.rel (0) target = $region37
    $region36: #{tpu_custom_call.1} parent=1 // pred_region
      %1526 = dma.done [#allocation5], 1024
    $region37: #{tpu_custom_call.1} parent=1 // pred_fallthru
      _
    // Predicated region
    $region38: #{tpu_custom_call.1} parent=1 // pred_check
      _
    $region39: #{tpu_custom_call.1} parent=1 // pred_check_branch
      %1528 = sbr.rel (0) target = $region41
    $region40: #{tpu_custom_call.1} parent=1 // pred_region
      _
    $region41: #{tpu_custom_call.1} parent=1 // pred_fallthru
      _
    %1529 = vsyncpa [#allocation4], 1
    %1530 = vsyncpa [#allocation7], 1
    %1531 = vsyncpa [#allocation5], 1

</llo_original>
